<compile_context>
chip_gen: v7x
topology: tpu7x:2x2x1
jax: 0.10.0
libtpu: 0.0.40
codegen_flags: <defaults>
</compile_context>

<pallas_src>
import functools

import jax
import jax.numpy as jnp
import numpy as np
from jax.experimental import pallas as pl
from jax.experimental.pallas import tpu as pltpu


# ---------------------------------------------------------------------------
# Phase 1: support = X @ W   (tiled over node rows, weight resident)
# ---------------------------------------------------------------------------
def support_kernel(x_ref, w_ref, s_ref):
    s_ref[...] = jnp.dot(
        x_ref[...], w_ref[...], preferred_element_type=jnp.float32
    ).astype(s_ref.dtype)


# ---------------------------------------------------------------------------
# Phase 2: out = relu(adj @ support + bias)
#   grid = (row tiles i, contraction tiles k). The output block index is constant
#   across k, so out_ref stays VMEM-resident and is used directly as the f32
#   accumulator: zeroed at k == 0, bias + ReLU applied in place at the last k.
#   When `support_resident`, s_ref is the whole padded support matrix (constant
#   block index -> DMA'd once); the k-th (tk, Dout) slab is sliced in VMEM.
# ---------------------------------------------------------------------------
def aggregate_kernel(adj_ref, s_ref, b_ref, out_ref, *, tk, support_resident):
    k = pl.program_id(1)

    @pl.when(k == 0)
    def _init():
        out_ref[...] = jnp.zeros_like(out_ref)

    if support_resident:
        start = pl.multiple_of(k * tk, tk)
        s = s_ref[pl.ds(start, tk), :]
    else:
        s = s_ref[...]

    out_ref[...] += jnp.dot(adj_ref[...], s, preferred_element_type=jnp.float32)

    @pl.when(k == pl.num_programs(1) - 1)
    def _finalize():
        out_ref[...] = jnp.maximum(out_ref[...] + b_ref[...], 0.0)


# ---------------------------------------------------------------------------
# Helpers
# ---------------------------------------------------------------------------
def _round_up(x, m):
    return ((x + m - 1) // m) * m


def _pad2d(a, rows, cols, dtype):
    """Cast only if needed; pad only if needed (avoids a copy when already aligned)."""
    if a.dtype != dtype:
        a = a.astype(dtype)
    pr, pc = rows - a.shape[0], cols - a.shape[1]
    if pr or pc:
        a = jnp.pad(a, ((0, pr), (0, pc)))
    return a


def _vmem_limit_bytes():
    limit = 48 << 20  # safe everywhere, incl. v7x (64 MiB physical)
    try:
        if pltpu.get_tpu_info().vmem_capacity_bytes >= (128 << 20):
            limit = 96 << 20  # v5e / v6e have 128 MiB physical
    except Exception:
        pass
    return limit


# ---------------------------------------------------------------------------
# Wrapper
# ---------------------------------------------------------------------------
def graph_convolution(x, adj, weight, bias, *, tm=512, tk=1024, tm1=4096,
                      max_resident_support_bytes=12 << 20):
    """x: [N, Din], adj: [N, N], weight: [Din, Dout], bias: [Dout] -> [N, Dout] f32."""
    N, Din = x.shape
    Dout = weight.shape[1]

    # ---- layout plumbing -----------------------------------------------------
    dout_p = _round_up(Dout, 128)                 # lane-dense output, no extra padding
    tm_eff = min(tm, _round_up(N, 8))             # adj-tile sublane dim
    tk_eff = min(tk, _round_up(N, 128))           # adj-tile lane / contraction dim

    n_row_p = _round_up(N, tm_eff)                # adj rows / output rows
    n_col_p = _round_up(N, tk_eff)                # adj cols / x & support rows

    x_p = _pad2d(x, n_col_p, Din, jnp.bfloat16)
    adj_p = _pad2d(adj, n_row_p, n_col_p, jnp.bfloat16)   # no-op if aligned bf16 input
    w_p = _pad2d(weight, Din, dout_p, jnp.bfloat16)
    b_p = _pad2d(bias.reshape(1, -1), 1, dout_p, jnp.float32)

    vmem_limit = _vmem_limit_bytes()

    # ---- phase 1: support = X @ W (few big row tiles) ------------------------
    # Largest multiple of tk_eff that divides n_col_p and is <= tm1.
    tm1_eff = tk_eff
    m = tk_eff
    while m <= min(n_col_p, tm1):
        if n_col_p % m == 0:
            tm1_eff = m
        m += tk_eff

    support = pl.pallas_call(
        support_kernel,
        out_shape=jax.ShapeDtypeStruct((n_col_p, dout_p), jnp.bfloat16),
        grid_spec=pltpu.PrefetchScalarGridSpec(
            num_scalar_prefetch=0,
            grid=(n_col_p // tm1_eff,),
            in_specs=[
                pl.BlockSpec((tm1_eff, Din), lambda i: (i, 0)),
                pl.BlockSpec((Din, dout_p), lambda i: (0, 0)),   # weight resident
            ],
            out_specs=pl.BlockSpec((tm1_eff, dout_p), lambda i: (i, 0)),
        ),
        compiler_params=pltpu.CompilerParams(
            dimension_semantics=("parallel",),
            vmem_limit_bytes=vmem_limit,
        ),
        cost_estimate=pl.CostEstimate(
            flops=int(2 * n_col_p * Din * dout_p),
            transcendentals=0,
            bytes_accessed=int(n_col_p * Din * 2 + Din * dout_p * 2
                               + n_col_p * dout_p * 2),
        ),
    )(x_p, w_p)

    # ---- phase 2: out = relu(adj @ support + bias) ----------------------------
    support_bytes = n_col_p * dout_p * 2
    support_resident = support_bytes <= max_resident_support_bytes
    if support_resident:
        s_spec = pl.BlockSpec((n_col_p, dout_p), lambda i, k: (0, 0))  # whole matrix
        support_passes = 1
    else:
        s_spec = pl.BlockSpec((tk_eff, dout_p), lambda i, k: (k, 0))   # streamed
        support_passes = n_row_p // tm_eff

    kernel = functools.partial(aggregate_kernel, tk=tk_eff,
                               support_resident=support_resident)

    cost = pl.CostEstimate(
        flops=int(2 * n_row_p * n_col_p * dout_p),
        transcendentals=0,
        bytes_accessed=int(
            n_row_p * n_col_p * 2                      # bf16 adj stream (dominant)
            + support_passes * n_col_p * dout_p * 2    # bf16 support read(s)
            + dout_p * 4                               # bias
            + n_row_p * dout_p * 4                     # f32 output writeback
        ),
    )

    out_p = pl.pallas_call(
        kernel,
        out_shape=jax.ShapeDtypeStruct((n_row_p, dout_p), jnp.float32),
        grid_spec=pltpu.PrefetchScalarGridSpec(
            num_scalar_prefetch=0,
            grid=(n_row_p // tm_eff, n_col_p // tk_eff),
            in_specs=[
                pl.BlockSpec((tm_eff, tk_eff), lambda i, k: (i, k)),   # adj tile
                s_spec,                                                # support
                pl.BlockSpec((1, dout_p), lambda i, k: (0, 0)),        # bias resident
            ],
            out_specs=pl.BlockSpec((tm_eff, dout_p), lambda i, k: (i, 0)),
        ),
        compiler_params=pltpu.CompilerParams(
            dimension_semantics=("parallel", "arbitrary"),
            vmem_limit_bytes=vmem_limit,
        ),
        cost_estimate=cost,
    )(adj_p, support, b_p)

    # Slice off row / column padding.
    return out_p[:N, :Dout]


# ---------------------------------------------------------------------------
# Demo / correctness check
# ---------------------------------------------------------------------------
if __name__ == "__main__":
    N = 512        # number of graph nodes
    Din = 64       # input feature dim
    Dout = 32      # output feature dim

    key = jax.random.PRNGKey(0)
    kx, kadj, kw, kb = jax.random.split(key, 4)

    # Node features.
    x = jax.random.normal(kx, (N, Din), dtype=jnp.float32)

    # Symmetric, row-degree-normalized adjacency with self loops (typical GCN input).
    a_raw = (jax.random.uniform(kadj, (N, N)) < 0.05).astype(jnp.float32)
    a_sym = jnp.maximum(a_raw, a_raw.T) + jnp.eye(N, dtype=jnp.float32)
    deg = jnp.sum(a_sym, axis=1, keepdims=True)
    adj = a_sym / deg

    # Glorot & Bengio (2010) uniform init, matching reset_parameters().
    init_range = float(np.sqrt(6.0 / (Din + Dout)))
    weight = jax.random.uniform(kw, (Din, Dout), dtype=jnp.float32,
                                minval=-init_range, maxval=init_range)
    bias = jax.random.uniform(kb, (Dout,), dtype=jnp.float32,
                              minval=-init_range, maxval=init_range)

    # Pre-convert adj to bf16 outside the kernel hot path; N is already a multiple
    # of the tiles used below, so the wrapper makes no padded copy of adj at all.
    adj_bf16 = adj.astype(jnp.bfloat16)

    # Pure-JAX f32 reference (dropout=0, eval mode). Inputs are cast to bf16 inside
    # the kernel, so compare with a correspondingly loose tolerance.
    ref = jnp.maximum(adj @ (x @ weight) + bias, 0.0)

    # Small problem: 256x256 tiles so the contraction grid has >1 step.
    # (1) default path: support fully VMEM-resident in phase 2.
    fwd_resident = jax.jit(functools.partial(graph_convolution, tm=256, tk=256))
    out_r = jax.block_until_ready(fwd_resident(x, adj_bf16, weight, bias))
    np.testing.assert_allclose(np.asarray(out_r), np.asarray(ref), rtol=2e-2, atol=2e-2)

    # (2) streamed-support fallback path (used when support would not fit VMEM).
    fwd_stream = jax.jit(functools.partial(graph_convolution, tm=256, tk=256,
                                           max_resident_support_bytes=0))
    out_s = jax.block_until_ready(fwd_stream(x, adj_bf16, weight, bias))
    np.testing.assert_allclose(np.asarray(out_s), np.asarray(ref), rtol=2e-2, atol=2e-2)

    print("KERNEL_OK")
</pallas_src>

<mosaic_0001>
module attributes {stable_mosaic.version = 11 : i64} {
  func.func @support_kernel(%arg0: i32, %arg1: memref<512x64xbf16, #tpu.memory_space<vmem>>, %arg2: memref<64x128xbf16, #tpu.memory_space<vmem>>, %arg3: memref<512x128xbf16, #tpu.memory_space<vmem>>) attributes {dimension_semantics = [#tpu.dimension_semantics<parallel>], iteration_bounds = array<i64: 1>, scalar_prefetch = 0 : i64, scratch_operands = 0 : i64, tpu.core_type = #tpu.core_type<tc>, window_params = [{transform_indices = @transform_0, window_bounds = array<i64: 512, 64>}, {pipeline_mode = #tpu.pipeline_mode<synchronous>, transform_indices = @transform_1, window_bounds = array<i64: 64, 128>}, {transform_indices = @transform_2, window_bounds = array<i64: 512, 128>}]} {
    %c0 = arith.constant 0 : index
    %c0_0 = arith.constant 0 : index
    %0 = vector.load %arg1[%c0, %c0_0] : memref<512x64xbf16, #tpu.memory_space<vmem>>, vector<512x64xbf16>
    %c0_1 = arith.constant 0 : index
    %c0_2 = arith.constant 0 : index
    %1 = vector.load %arg2[%c0_1, %c0_2] : memref<64x128xbf16, #tpu.memory_space<vmem>>, vector<64x128xbf16>
    %cst = arith.constant dense<0.000000e+00> : vector<512x128xf32>
    %2 = tpu.matmul %0, %1, %cst {dimension_numbers = #tpu.dot_dimension_numbers<[1], [0], [0], [1], [0, 0, 1, 1], [], []>} : vector<512x64xbf16>, vector<64x128xbf16>, vector<512x128xf32> -> vector<512x128xf32>
    %3 = arith.truncf %2 : vector<512x128xf32> to vector<512x128xbf16>
    %c0_3 = arith.constant 0 : index
    %c0_4 = arith.constant 0 : index
    %4 = vector.load %arg3[%c0_3, %c0_4] : memref<512x128xbf16, #tpu.memory_space<vmem>>, vector<512x128xbf16>
    tpu.vector_store %arg3[%c0_3, %c0_4], %3 {strides = array<i32>} : memref<512x128xbf16, #tpu.memory_space<vmem>>, vector<512x128xbf16>,
    return
  }
  func.func @transform_0(%arg0: i32) -> (i32, i32) {
    %c0_i32 = arith.constant 0 : i32
    %c0_i32_0 = arith.constant 0 : i32
    return %arg0, %c0_i32 : i32, i32
  }
  func.func @transform_1(%arg0: i32) -> (i32, i32) {
    %c0_i32 = arith.constant 0 : i32
    %c0_i32_0 = arith.constant 0 : i32
    %c0_i32_1 = arith.constant 0 : i32
    return %c0_i32, %c0_i32_0 : i32, i32
  }
  func.func @transform_2(%arg0: i32) -> (i32, i32) {
    %c0_i32 = arith.constant 0 : i32
    %c0_i32_0 = arith.constant 0 : i32
    return %arg0, %c0_i32 : i32, i32
  }
}

module attributes {stable_mosaic.version = 11 : i64} {
  func.func @aggregate_kernel(%arg0: i32, %arg1: i32, %arg2: memref<256x256xbf16, #tpu.memory_space<vmem>>, %arg3: memref<512x128xbf16, #tpu.memory_space<vmem>>, %arg4: memref<1x128xf32, #tpu.memory_space<vmem>>, %arg5: memref<256x128xf32, #tpu.memory_space<vmem>>) attributes {dimension_semantics = [#tpu.dimension_semantics<parallel>, #tpu.dimension_semantics<arbitrary>], iteration_bounds = array<i64: 2, 2>, scalar_prefetch = 0 : i64, scratch_operands = 0 : i64, tpu.core_type = #tpu.core_type<tc>, window_params = [{transform_indices = @transform_0, window_bounds = array<i64: 256, 256>}, {pipeline_mode = #tpu.pipeline_mode<synchronous>, transform_indices = @transform_1, window_bounds = array<i64: 512, 128>}, {pipeline_mode = #tpu.pipeline_mode<synchronous>, transform_indices = @transform_2, window_bounds = array<i64: 1, 128>}, {transform_indices = @transform_3, window_bounds = array<i64: 256, 128>}]} {
    %c0_i32 = arith.constant 0 : i32
    %0 = arith.cmpi eq, %arg1, %c0_i32 : i32
    %1 = arith.extui %0 : i1 to i32
    %c0_i32_0 = arith.constant 0 : i32
    %2 = arith.cmpi ne, %1, %c0_i32_0 : i32
    scf.if %2 {
      %cst_8 = arith.constant 0.000000e+00 : f32
      %15 = vector.broadcast %cst_8 : f32 to vector<256x128xf32>
      %c0_9 = arith.constant 0 : index
      %c0_10 = arith.constant 0 : index
      %16 = vector.load %arg5[%c0_9, %c0_10] : memref<256x128xf32, #tpu.memory_space<vmem>>, vector<256x128xf32>
      tpu.vector_store %arg5[%c0_9, %c0_10], %15 {strides = array<i32>} : memref<256x128xf32, #tpu.memory_space<vmem>>, vector<256x128xf32>,
    } else {
    }
    %c256_i32 = arith.constant 256 : i32
    %3 = arith.muli %arg1, %c256_i32 : i32
    %4 = tpu.assume_multiple %3, 256 : i32
    %5 = arith.index_cast %4 : i32 to index
    %c0 = arith.constant 0 : index
    %6 = vector.load %arg3[%5, %c0] : memref<512x128xbf16, #tpu.memory_space<vmem>>, vector<256x128xbf16>
    %c0_1 = arith.constant 0 : index
    %c0_2 = arith.constant 0 : index
    %7 = vector.load %arg5[%c0_1, %c0_2] : memref<256x128xf32, #tpu.memory_space<vmem>>, vector<256x128xf32>
    %c0_3 = arith.constant 0 : index
    %c0_4 = arith.constant 0 : index
    %8 = vector.load %arg2[%c0_3, %c0_4] : memref<256x256xbf16, #tpu.memory_space<vmem>>, vector<256x256xbf16>
    %cst = arith.constant dense<0.000000e+00> : vector<256x128xf32>
    %9 = tpu.matmul %8, %6, %cst {dimension_numbers = #tpu.dot_dimension_numbers<[1], [0], [0], [1], [0, 0, 1, 1], [], []>} : vector<256x256xbf16>, vector<256x128xbf16>, vector<256x128xf32> -> vector<256x128xf32>
    %10 = arith.addf %7, %9 : vector<256x128xf32>
    %c0_5 = arith.constant 0 : index
    %c0_6 = arith.constant 0 : index
    %11 = vector.load %arg5[%c0_5, %c0_6] : memref<256x128xf32, #tpu.memory_space<vmem>>, vector<256x128xf32>
    tpu.vector_store %arg5[%c0_5, %c0_6], %10 {strides = array<i32>} : memref<256x128xf32, #tpu.memory_space<vmem>>, vector<256x128xf32>,
    %c1_i32 = arith.constant 1 : i32
    %12 = arith.cmpi eq, %arg1, %c1_i32 : i32
    %13 = arith.extui %12 : i1 to i32
    %c0_i32_7 = arith.constant 0 : i32
    %14 = arith.cmpi ne, %13, %c0_i32_7 : i32
    scf.if %14 {
      %c0_8 = arith.constant 0 : index
      %c0_9 = arith.constant 0 : index
      %15 = vector.load %arg5[%c0_8, %c0_9] : memref<256x128xf32, #tpu.memory_space<vmem>>, vector<256x128xf32>
      %c0_10 = arith.constant 0 : index
      %c0_11 = arith.constant 0 : index
      %16 = vector.load %arg4[%c0_10, %c0_11] : memref<1x128xf32, #tpu.memory_space<vmem>>, vector<1x128xf32>
      %17 = vector.broadcast %16 : vector<1x128xf32> to vector<256x128xf32>
      %18 = arith.addf %15, %17 : vector<256x128xf32>
      %cst_12 = arith.constant 0.000000e+00 : f32
      %19 = vector.broadcast %cst_12 : f32 to vector<256x128xf32>
      %20 = arith.maximumf %18, %19 : vector<256x128xf32>
      %c0_13 = arith.constant 0 : index
      %c0_14 = arith.constant 0 : index
      %21 = vector.load %arg5[%c0_13, %c0_14] : memref<256x128xf32, #tpu.memory_space<vmem>>, vector<256x128xf32>
      tpu.vector_store %arg5[%c0_13, %c0_14], %20 {strides = array<i32>} : memref<256x128xf32, #tpu.memory_space<vmem>>, vector<256x128xf32>,
    } else {
    }
    return
  }
  func.func @transform_0(%arg0: i32, %arg1: i32) -> (i32, i32) {
    %c0_i32 = arith.constant 0 : i32
    return %arg0, %arg1 : i32, i32
  }
  func.func @transform_1(%arg0: i32, %arg1: i32) -> (i32, i32) {
    %c0_i32 = arith.constant 0 : i32
    %c0_i32_0 = arith.constant 0 : i32
    %c0_i32_1 = arith.constant 0 : i32
    return %c0_i32, %c0_i32_0 : i32, i32
  }
  func.func @transform_2(%arg0: i32, %arg1: i32) -> (i32, i32) {
    %c0_i32 = arith.constant 0 : i32
    %c0_i32_0 = arith.constant 0 : i32
    %c0_i32_1 = arith.constant 0 : i32
    return %c0_i32, %c0_i32_0 : i32, i32
  }
  func.func @transform_3(%arg0: i32, %arg1: i32) -> (i32, i32) {
    %c0_i32 = arith.constant 0 : i32
    %c0_i32_0 = arith.constant 0 : i32
    return %arg0, %c0_i32 : i32, i32
  }
}

</mosaic_0001>

<llo_original>
// kernel: graph_convolution.3
$region0: #{graph_convolution.3}
  #allocation0 [shape = 'u32[]', space=smem, size = 0x4, offset = 0x4, fixed_abs, tag = 'smem constant byte address 0x4 - core index']
  #allocation1 [shape = 'u32[144,128]{1,0:T(1,128)}', space=vmem, size = 0x12000, scoped, tag = 'internal scratch']
  %s0 = inlined_call_operand.vmem [shape: bf16[512,512], index: 0, kind: input, shape index: {}]
  %s1 = inlined_call_operand.vmem [shape: bf16[512,128], index: 1, kind: input, shape index: {}]
  %s2 = inlined_call_operand.vmem [shape: f32[1,128], index: 2, kind: input, shape index: {}]
  %s3 = inlined_call_operand.vmem [shape: f32[512,128], index: 3, kind: output, shape index: {}]
  %s4 = sld [smem:[#allocation0]]
  $region91: #{graph_convolution.3} parent=0
    _
  %s6 = ssub.s32 1, %s4
  %s7 = scalar_select 0, %s6, %s4
  $region1: #{graph_convolution.3} parent=0
    #allocation2 [shape = 'u8[262144]{0}', space=vmem, size = 0x40000, scoped, tag = 'input window, operand 0']
    loop: start=0, step=1, limit=6
    $region2: #{graph_convolution.3} parent=1 // loop_pre_header
      _
    $region3: #{graph_convolution.3} parent=1 // loop_header
      %s9 = sphi 0, %s13
      %p10 = scmp.ge.s32.totalorder %s9, 6
      %s16 = sphi 0, %s28
      %s17 = sphi 0, %s24
      %s18 = sphi 0, %s16
      %s19 = sphi 0, %s17
      %s20 = sphi 0, %s18
      %s21 = sphi 0, %s19
      %s33 = sphi 0, %s35
      %s36 = sphi 0, %s33
      %s37 = sphi 0, %s36
      %s53 = sphi 0, %s37
      %s57 = sphi 0, %s57
      %s59 = sphi 0, %s57
      %s60 = sphi 0, %s59
      %s74 = sphi 0, %s60
      %s78 = sphi 0, %s78
      %s80 = sphi 0, %s78
      %s81 = sphi 0, %s80
      %s95 = sphi 0, %s81
      %s101 = sphi 0, %s103
      %s104 = sphi 0, %s101
      %s105 = sphi 0, %s104
      %s121 = sphi 0, %s105
    $region4: #{graph_convolution.3} parent=1 // loop_header_branch
      %12 = sbr.rel (%p10) target = $region8
    $region5: #{graph_convolution.3} parent=1 // loop_body
      %s14 = ssub.s32 %s9, 1
      %s15 = ssub.s32 %s9, 2
      %s22 = sadd.s32 1, %s17
      %p23 = scmp.ge.s32.totalorder %s22, 2
      %s24 = scalar_select %p23, 0, %s22
      %s25 = sadd.s32 1, %s16
      %s26 = scalar_select %p23, %s25, %s16
      %p27 = scmp.ge.s32.totalorder %s26, 2
      %s28 = scalar_select %p27, 0, %s26
      %s29 = ssub.s32 %s16, %s28
      %s30 = ssub.s32 %s17, %s24
      %s31 = sor.u32 %s29, %s30
      %p32 = scmp.eq.s32.totalorder %s31, 0
      %s34 = sadd.s32 %s33, 1
      %s35 = scalar_select %p32, %s33, %s34
      %p38 = pneg %p32
      %p39 = scmp.eq.s32.totalorder %s9, 3
      %p40 = por %p38, %p39
      %p41 = scmp.ne.s32.totalorder %s33, %s36
      %p42 = scmp.eq.s32.totalorder %s9, 0
      %p43 = por %p41, %p42
      %p44 = scmp.ne.s32.totalorder %s33, %s36
      %p45 = scmp.eq.s32.totalorder %s14, 3
      %p46 = por %p44, %p45
      %p47 = scmp.ne.s32.totalorder %s36, %s37
      %p48 = scmp.eq.s32.totalorder %s14, 0
      %p49 = por %p47, %p48
      %p50 = scmp.ne.s32.totalorder %s36, %s37
      %p51 = scmp.eq.s32.totalorder %s15, 3
      %p52 = por %p50, %p51
      %p54 = scmp.ne.s32.totalorder %s37, %s53
      %p55 = scmp.eq.s32.totalorder %s15, 0
      %p56 = por %p54, %p55
      %s58 = sadd.s32 %s57, 1
      %p61 = scmp.eq.s32.totalorder %s9, 3
      %p62 = scmp.ne.s32.totalorder %s57, %s59
      %p63 = scmp.eq.s32.totalorder %s9, 0
      %p64 = por %p62, %p63
      %p65 = scmp.ne.s32.totalorder %s57, %s59
      %p66 = scmp.eq.s32.totalorder %s14, 3
      %p67 = por %p65, %p66
      %p68 = scmp.ne.s32.totalorder %s59, %s60
      %p69 = scmp.eq.s32.totalorder %s14, 0
      %p70 = por %p68, %p69
      %p71 = scmp.ne.s32.totalorder %s59, %s60
      %p72 = scmp.eq.s32.totalorder %s15, 3
      %p73 = por %p71, %p72
      %p75 = scmp.ne.s32.totalorder %s60, %s74
      %p76 = scmp.eq.s32.totalorder %s15, 0
      %p77 = por %p75, %p76
      %s79 = sadd.s32 %s78, 1
      %p82 = scmp.eq.s32.totalorder %s9, 3
      %p83 = scmp.ne.s32.totalorder %s78, %s80
      %p84 = scmp.eq.s32.totalorder %s9, 0
      %p85 = por %p83, %p84
      %p86 = scmp.ne.s32.totalorder %s78, %s80
      %p87 = scmp.eq.s32.totalorder %s14, 3
      %p88 = por %p86, %p87
      %p89 = scmp.ne.s32.totalorder %s80, %s81
      %p90 = scmp.eq.s32.totalorder %s14, 0
      %p91 = por %p89, %p90
      %p92 = scmp.ne.s32.totalorder %s80, %s81
      %p93 = scmp.eq.s32.totalorder %s15, 3
      %p94 = por %p92, %p93
      %p96 = scmp.ne.s32.totalorder %s81, %s95
      %p97 = scmp.eq.s32.totalorder %s15, 0
      %p98 = por %p96, %p97
      %s99 = ssub.s32 %s16, %s28
      %p100 = scmp.eq.s32.totalorder %s99, 0
      %s102 = sadd.s32 %s101, 1
      %s103 = scalar_select %p100, %s101, %s102
      %p106 = pneg %p100
      %p107 = scmp.eq.s32.totalorder %s9, 3
      %p108 = por %p106, %p107
      %p109 = scmp.ne.s32.totalorder %s101, %s104
      %p110 = scmp.eq.s32.totalorder %s9, 0
      %p111 = por %p109, %p110
      %p112 = scmp.ne.s32.totalorder %s101, %s104
      %p113 = scmp.eq.s32.totalorder %s14, 3
      %p114 = por %p112, %p113
      %p115 = scmp.ne.s32.totalorder %s104, %s105
      %p116 = scmp.eq.s32.totalorder %s14, 0
      %p117 = por %p115, %p116
      %p118 = scmp.ne.s32.totalorder %s104, %s105
      %p119 = scmp.eq.s32.totalorder %s15, 3
      %p120 = por %p118, %p119
      %p122 = scmp.ne.s32.totalorder %s105, %s121
      %p123 = scmp.eq.s32.totalorder %s15, 0
      %p124 = por %p122, %p123
      %p125 = scmp.le.s32.totalorder 1, %s9
      %p126 = scmp.lt.s32.totalorder %s9, 5
      %p127 = pnand %p125, %p126
      %p128 = pneg %p127
      // Predicated region
      $region9: #{graph_convolution.3} parent=5 // pred_check
        _
      $region10: #{graph_convolution.3} parent=5 // pred_check_branch
        %130 = sbr.rel (%p127) target = $region12
      $region11: #{graph_convolution.3} parent=5 // pred_region
        %s131 = ssub.s32 %s9, 1
        // Predicated region
        $region13: #{graph_convolution.3} parent=11 // pred_check
          %p132 = pneg %p70
        $region14: #{graph_convolution.3} parent=11 // pred_check_branch
          %134 = sbr.rel (%p132) target = $region16
        $region15: #{graph_convolution.3} parent=11 // pred_region
          _
        $region16: #{graph_convolution.3} parent=11 // pred_fallthru
          _
        // Predicated region
        $region17: #{graph_convolution.3} parent=11 // pred_check
          %p135 = pneg %p91
        $region18: #{graph_convolution.3} parent=11 // pred_check_branch
          %137 = sbr.rel (%p135) target = $region20
        $region19: #{graph_convolution.3} parent=11 // pred_region
          _
        $region20: #{graph_convolution.3} parent=11 // pred_fallthru
          _
      $region12: #{graph_convolution.3} parent=5 // pred_fallthru
        _
      %p138 = scmp.lt.s32.totalorder %s9, 4
      // Predicated region
      $region21: #{graph_convolution.3} parent=5 // pred_check
        %p139 = pneg %p138
      $region22: #{graph_convolution.3} parent=5 // pred_check_branch
        %141 = sbr.rel (%p139) target = $region24
      $region23: #{graph_convolution.3} parent=5 // pred_region
        // Predicated region
        $region25: #{graph_convolution.3} parent=23 // pred_check
          %p142 = pneg %p43
        $region26: #{graph_convolution.3} parent=23 // pred_check_branch
          %144 = sbr.rel (%p142) target = $region28
        $region27: #{graph_convolution.3} parent=23 // pred_region
          %s145 = sand.u32 %s33, 1
          %s146 = sand.u32 %s33, 1
          %s147 = smul.addr %s146, 256
          %s148 = scalar_lea.vmem [#allocation2], %s147
          %s149 = smul.u32 32, %s16
          %s150 = smul.u32 2, %s17
          %s151 = smul.addr %s149, 4
          %s152 = sadd.s32 %s150, %s151
          %s153 = smul.addr %s152, 4
          %s154 = scalar_lea.vmem %s0, %s153
          // Predicated region
          $region29: #{graph_convolution.3} parent=27 // pred_check
            _
          $region30: #{graph_convolution.3} parent=27 // pred_check_branch
            %156 = sbr.rel (0) target = $region32
          $region31: #{graph_convolution.3} parent=27 // pred_region
            // Predicated region
            $region33: #{graph_convolution.3} parent=31 // pred_check
              _
            $region34: #{graph_convolution.3} parent=31 // pred_check_branch
              %158 = sbr.rel (0) target = $region36
            $region35: #{graph_convolution.3} parent=31 // pred_region
              // Predicated region
              $region48: #{graph_convolution.3} parent=35 // pred_check
                _
              $region49: #{graph_convolution.3} parent=35 // pred_check_branch
                %235 = sbr.rel (0) target = $region51
              $region50: #{graph_convolution.3} parent=35 // pred_region
                loop: start=0, step=1, limit=1
                $region52: #{graph_convolution.3} parent=50 // loop_pre_header
                  _
                $region53: #{graph_convolution.3} parent=50 // loop_header
                  %s237 = sphi 0, %s241
                  %p238 = scmp.ge.s32.totalorder %s237, 1
                  %s242 = sphi %s154, %s154
                  %s243 = sphi %s148, %s148
                $region54: #{graph_convolution.3} parent=50 // loop_header_branch
                  %240 = sbr.rel (%p238) target = $region58
                $region55: #{graph_convolution.3} parent=50 // loop_body
                  %v244 = vld [vmem:[%s242] sm:$0xff]
                  %245 = vst [vmem:[%s243] sm:$0xff] %v244
                  %v246 = vld [vmem:[%s242 + $0x10] sm:$0xff]
                  %247 = vst [vmem:[%s243 + $0x8] sm:$0xff] %v246
                  %v248 = vld [vmem:[%s242 + $0x20] sm:$0xff]
                  %249 = vst [vmem:[%s243 + $0x10] sm:$0xff] %v248
                  %v250 = vld [vmem:[%s242 + $0x30] sm:$0xff]
                  %251 = vst [vmem:[%s243 + $0x18] sm:$0xff] %v250
                  %v252 = vld [vmem:[%s242 + $0x40] sm:$0xff]
                  %253 = vst [vmem:[%s243 + $0x20] sm:$0xff] %v252
                  %v254 = vld [vmem:[%s242 + $0x50] sm:$0xff]
                  %255 = vst [vmem:[%s243 + $0x28] sm:$0xff] %v254
                  %v256 = vld [vmem:[%s242 + $0x60] sm:$0xff]
                  %257 = vst [vmem:[%s243 + $0x30] sm:$0xff] %v256
                  %v258 = vld [vmem:[%s242 + $0x70] sm:$0xff]
                  %259 = vst [vmem:[%s243 + $0x38] sm:$0xff] %v258
                  %v260 = vld [vmem:[%s242 + $0x80] sm:$0xff]
                  %261 = vst [vmem:[%s243 + $0x40] sm:$0xff] %v260
                  %v262 = vld [vmem:[%s242 + $0x90] sm:$0xff]
                  %263 = vst [vmem:[%s243 + $0x48] sm:$0xff] %v262
                  %v264 = vld [vmem:[%s242 + $0xa0] sm:$0xff]
                  %265 = vst [vmem:[%s243 + $0x50] sm:$0xff] %v264
                  %v266 = vld [vmem:[%s242 + $0xb0] sm:$0xff]
                  %267 = vst [vmem:[%s243 + $0x58] sm:$0xff] %v266
                  %v268 = vld [vmem:[%s242 + $0xc0] sm:$0xff]
                  %269 = vst [vmem:[%s243 + $0x60] sm:$0xff] %v268
                  %v270 = vld [vmem:[%s242 + $0xd0] sm:$0xff]
                  %271 = vst [vmem:[%s243 + $0x68] sm:$0xff] %v270
                  %v272 = vld [vmem:[%s242 + $0xe0] sm:$0xff]
                  %273 = vst [vmem:[%s243 + $0x70] sm:$0xff] %v272
                  %v274 = vld [vmem:[%s242 + $0xf0] sm:$0xff]
                  %275 = vst [vmem:[%s243 + $0x78] sm:$0xff] %v274
                  %v276 = vld [vmem:[%s242 + $0x100] sm:$0xff]
                  %277 = vst [vmem:[%s243 + $0x80] sm:$0xff] %v276
                  %v278 = vld [vmem:[%s242 + $0x110] sm:$0xff]
                  %279 = vst [vmem:[%s243 + $0x88] sm:$0xff] %v278
                  %v280 = vld [vmem:[%s242 + $0x120] sm:$0xff]
                  %281 = vst [vmem:[%s243 + $0x90] sm:$0xff] %v280
                  %v282 = vld [vmem:[%s242 + $0x130] sm:$0xff]
                  %283 = vst [vmem:[%s243 + $0x98] sm:$0xff] %v282
                  %v284 = vld [vmem:[%s242 + $0x140] sm:$0xff]
                  %285 = vst [vmem:[%s243 + $0xa0] sm:$0xff] %v284
                  %v286 = vld [vmem:[%s242 + $0x150] sm:$0xff]
                  %287 = vst [vmem:[%s243 + $0xa8] sm:$0xff] %v286
                  %v288 = vld [vmem:[%s242 + $0x160] sm:$0xff]
                  %289 = vst [vmem:[%s243 + $0xb0] sm:$0xff] %v288
                  %v290 = vld [vmem:[%s242 + $0x170] sm:$0xff]
                  %291 = vst [vmem:[%s243 + $0xb8] sm:$0xff] %v290
                  %v292 = vld [vmem:[%s242 + $0x180] sm:$0xff]
                  %293 = vst [vmem:[%s243 + $0xc0] sm:$0xff] %v292
                  %v294 = vld [vmem:[%s242 + $0x190] sm:$0xff]
                  %295 = vst [vmem:[%s243 + $0xc8] sm:$0xff] %v294
                  %v296 = vld [vmem:[%s242 + $0x1a0] sm:$0xff]
                  %297 = vst [vmem:[%s243 + $0xd0] sm:$0xff] %v296
                  %v298 = vld [vmem:[%s242 + $0x1b0] sm:$0xff]
                  %299 = vst [vmem:[%s243 + $0xd8] sm:$0xff] %v298
                  %v300 = vld [vmem:[%s242 + $0x1c0] sm:$0xff]
                  %301 = vst [vmem:[%s243 + $0xe0] sm:$0xff] %v300
                  %v302 = vld [vmem:[%s242 + $0x1d0] sm:$0xff]
                  %303 = vst [vmem:[%s243 + $0xe8] sm:$0xff] %v302
                  %v304 = vld [vmem:[%s242 + $0x1e0] sm:$0xff]
                  %305 = vst [vmem:[%s243 + $0xf0] sm:$0xff] %v304
                  %v306 = vld [vmem:[%s242 + $0x1f0] sm:$0xff]
                  %307 = vst [vmem:[%s243 + $0xf8] sm:$0xff] %v306
                $region56: #{graph_convolution.3} parent=50 // loop_footer
                  %s241 = sadd.s32 1, %s237
                $region57: #{graph_convolution.3} parent=50 // loop_footer_branch
                  %236 = sbr.rel target = $region53
                $region58: #{graph_convolution.3} parent=50 // loop_exit
                  _
              $region51: #{graph_convolution.3} parent=35 // pred_fallthru
                _
              // Predicated region
              $region59: #{graph_convolution.3} parent=35 // pred_check
                _
              $region60: #{graph_convolution.3} parent=35 // pred_check_branch
                %309 = sbr.rel target = $region62
              $region61: #{graph_convolution.3} parent=35 // pred_region
                _
              $region62: #{graph_convolution.3} parent=35 // pred_fallthru
                _
            $region36: #{graph_convolution.3} parent=31 // pred_fallthru
              _
            // Predicated region
            $region37: #{graph_convolution.3} parent=31 // pred_check
              _
            $region38: #{graph_convolution.3} parent=31 // pred_check_branch
              %160 = sbr.rel target = $region40
            $region39: #{graph_convolution.3} parent=31 // pred_region
              loop: start=0, step=1, limit=1
              $region41: #{graph_convolution.3} parent=39 // loop_pre_header
                _
              $region42: #{graph_convolution.3} parent=39 // loop_header
                %s163 = sphi 0, %s167
                %p164 = scmp.ge.s32.totalorder %s163, 1
                %s168 = sphi %s154, %s154
                %s169 = sphi %s148, %s148
              $region43: #{graph_convolution.3} parent=39 // loop_header_branch
                %166 = sbr.rel (%p164) target = $region47
              $region44: #{graph_convolution.3} parent=39 // loop_body
                %v170 = vld [vmem:[%s168] sm:$0xff]
                %171 = vst [vmem:[%s169] sm:$0xff] %v170
                %v172 = vld [vmem:[%s168 + $0x10] sm:$0xff]
                %173 = vst [vmem:[%s169 + $0x8] sm:$0xff] %v172
                %v174 = vld [vmem:[%s168 + $0x20] sm:$0xff]
                %175 = vst [vmem:[%s169 + $0x10] sm:$0xff] %v174
                %v176 = vld [vmem:[%s168 + $0x30] sm:$0xff]
                %177 = vst [vmem:[%s169 + $0x18] sm:$0xff] %v176
                %v178 = vld [vmem:[%s168 + $0x40] sm:$0xff]
                %179 = vst [vmem:[%s169 + $0x20] sm:$0xff] %v178
                %v180 = vld [vmem:[%s168 + $0x50] sm:$0xff]
                %181 = vst [vmem:[%s169 + $0x28] sm:$0xff] %v180
                %v182 = vld [vmem:[%s168 + $0x60] sm:$0xff]
                %183 = vst [vmem:[%s169 + $0x30] sm:$0xff] %v182
                %v184 = vld [vmem:[%s168 + $0x70] sm:$0xff]
                %185 = vst [vmem:[%s169 + $0x38] sm:$0xff] %v184
                %v186 = vld [vmem:[%s168 + $0x80] sm:$0xff]
                %187 = vst [vmem:[%s169 + $0x40] sm:$0xff] %v186
                %v188 = vld [vmem:[%s168 + $0x90] sm:$0xff]
                %189 = vst [vmem:[%s169 + $0x48] sm:$0xff] %v188
                %v190 = vld [vmem:[%s168 + $0xa0] sm:$0xff]
                %191 = vst [vmem:[%s169 + $0x50] sm:$0xff] %v190
                %v192 = vld [vmem:[%s168 + $0xb0] sm:$0xff]
                %193 = vst [vmem:[%s169 + $0x58] sm:$0xff] %v192
                %v194 = vld [vmem:[%s168 + $0xc0] sm:$0xff]
                %195 = vst [vmem:[%s169 + $0x60] sm:$0xff] %v194
                %v196 = vld [vmem:[%s168 + $0xd0] sm:$0xff]
                %197 = vst [vmem:[%s169 + $0x68] sm:$0xff] %v196
                %v198 = vld [vmem:[%s168 + $0xe0] sm:$0xff]
                %199 = vst [vmem:[%s169 + $0x70] sm:$0xff] %v198
                %v200 = vld [vmem:[%s168 + $0xf0] sm:$0xff]
                %201 = vst [vmem:[%s169 + $0x78] sm:$0xff] %v200
                %v202 = vld [vmem:[%s168 + $0x100] sm:$0xff]
                %203 = vst [vmem:[%s169 + $0x80] sm:$0xff] %v202
                %v204 = vld [vmem:[%s168 + $0x110] sm:$0xff]
                %205 = vst [vmem:[%s169 + $0x88] sm:$0xff] %v204
                %v206 = vld [vmem:[%s168 + $0x120] sm:$0xff]
                %207 = vst [vmem:[%s169 + $0x90] sm:$0xff] %v206
                %v208 = vld [vmem:[%s168 + $0x130] sm:$0xff]
                %209 = vst [vmem:[%s169 + $0x98] sm:$0xff] %v208
                %v210 = vld [vmem:[%s168 + $0x140] sm:$0xff]
                %211 = vst [vmem:[%s169 + $0xa0] sm:$0xff] %v210
                %v212 = vld [vmem:[%s168 + $0x150] sm:$0xff]
                %213 = vst [vmem:[%s169 + $0xa8] sm:$0xff] %v212
                %v214 = vld [vmem:[%s168 + $0x160] sm:$0xff]
                %215 = vst [vmem:[%s169 + $0xb0] sm:$0xff] %v214
                %v216 = vld [vmem:[%s168 + $0x170] sm:$0xff]
                %217 = vst [vmem:[%s169 + $0xb8] sm:$0xff] %v216
                %v218 = vld [vmem:[%s168 + $0x180] sm:$0xff]
                %219 = vst [vmem:[%s169 + $0xc0] sm:$0xff] %v218
                %v220 = vld [vmem:[%s168 + $0x190] sm:$0xff]
                %221 = vst [vmem:[%s169 + $0xc8] sm:$0xff] %v220
                %v222 = vld [vmem:[%s168 + $0x1a0] sm:$0xff]
                %223 = vst [vmem:[%s169 + $0xd0] sm:$0xff] %v222
                %v224 = vld [vmem:[%s168 + $0x1b0] sm:$0xff]
                %225 = vst [vmem:[%s169 + $0xd8] sm:$0xff] %v224
                %v226 = vld [vmem:[%s168 + $0x1c0] sm:$0xff]
                %227 = vst [vmem:[%s169 + $0xe0] sm:$0xff] %v226
                %v228 = vld [vmem:[%s168 + $0x1d0] sm:$0xff]
                %229 = vst [vmem:[%s169 + $0xe8] sm:$0xff] %v228
                %v230 = vld [vmem:[%s168 + $0x1e0] sm:$0xff]
                %231 = vst [vmem:[%s169 + $0xf0] sm:$0xff] %v230
                %v232 = vld [vmem:[%s168 + $0x1f0] sm:$0xff]
                %233 = vst [vmem:[%s169 + $0xf8] sm:$0xff] %v232
              $region45: #{graph_convolution.3} parent=39 // loop_footer
                %s167 = sadd.s32 1, %s163
              $region46: #{graph_convolution.3} parent=39 // loop_footer_branch
                %162 = sbr.rel target = $region42
              $region47: #{graph_convolution.3} parent=39 // loop_exit
                _
            $region40: #{graph_convolution.3} parent=31 // pred_fallthru
              _
          $region32: #{graph_convolution.3} parent=27 // pred_fallthru
            _
          %310 = vnop
        $region28: #{graph_convolution.3} parent=23 // pred_fallthru
          _
      $region24: #{graph_convolution.3} parent=5 // pred_fallthru
        _
      %p311 = scmp.le.s32.totalorder 1, %s9
      %p312 = scmp.lt.s32.totalorder %s9, 5
      %p313 = pnand %p311, %p312
      %p314 = pneg %p313
      // Predicated region
      $region63: #{graph_convolution.3} parent=5 // pred_check
        _
      $region64: #{graph_convolution.3} parent=5 // pred_check_branch
        %316 = sbr.rel (%p313) target = $region66
      $region65: #{graph_convolution.3} parent=5 // pred_region
        %s317 = ssub.s32 %s9, 1
        %s318 = sand.u32 %s36, 1
        %s319 = sand.u32 %s36, 1
        %s320 = smul.addr %s319, 256
        %s321 = scalar_lea.vmem [#allocation2], %s320
        // Predicated region
        $region67: #{graph_convolution.3} parent=65 // pred_check
          %p322 = pneg %p49
        $region68: #{graph_convolution.3} parent=65 // pred_check_branch
          %324 = sbr.rel (%p322) target = $region70
        $region69: #{graph_convolution.3} parent=65 // pred_region
          _
        $region70: #{graph_convolution.3} parent=65 // pred_fallthru
          _
        %s325 = sand.u32 %s36, 1
        %s326 = sand.u32 %s36, 1
        %s327 = smul.addr %s326, 256
        %s328 = scalar_lea.vmem [#allocation2], %s327
        %p329 = pneg %p49
        %p330 = pneg %p46
        %p331 = pneg %p70
        %p332 = pneg %p67
        %p333 = pneg %p91
        %p334 = pneg %p88
        %p335 = pneg %p117
        %p336 = pneg %p114
        %s337 = smul.u32 32, %s18
        %p338 = scmp.lt.s32.totalorder %s337, 63
        %s339 = scalar_select %p338, %s337, 63
        %s340 = smul.addr %s339, 8
        %s341 = scalar_lea.vmem %s3, %s340
        %s342 = smul.u32 32, %s18
        %s343 = smul.u32 2, %s19
        %s344 = smul.u32 32, %s18
        %p345 = scmp.lt.s32.totalorder %s344, 63
        %s346 = scalar_select %p345, %s344, 63
        %s347 = smul.addr %s346, 8
        %s348 = scalar_lea.vmem %s3, %s347
        %s349 = smul.u32 32, %s18
        %p351 = scmp.eq.s32.totalorder %s19, 0
        // Predicated region
        $region71: #{graph_convolution.3} parent=65 // pred_check
          %p352 = pneg %p351
        $region72: #{graph_convolution.3} parent=65 // pred_check_branch
          %354 = sbr.rel (%p352) target = $region74
        $region73: #{graph_convolution.3} parent=65 // pred_region
          %355 = vst [vmem:[%s348] sm:$0xff] 0.0
          %356 = vst [vmem:[%s348 + $0x8] sm:$0xff] 0.0
          %357 = vst [vmem:[%s348 + $0x10] sm:$0xff] 0.0
          %358 = vst [vmem:[%s348 + $0x18] sm:$0xff] 0.0
          %359 = vst [vmem:[%s348 + $0x20] sm:$0xff] 0.0
          %360 = vst [vmem:[%s348 + $0x28] sm:$0xff] 0.0
          %361 = vst [vmem:[%s348 + $0x30] sm:$0xff] 0.0
          %362 = vst [vmem:[%s348 + $0x38] sm:$0xff] 0.0
          %363 = vst [vmem:[%s348 + $0x40] sm:$0xff] 0.0
          %364 = vst [vmem:[%s348 + $0x48] sm:$0xff] 0.0
          %365 = vst [vmem:[%s348 + $0x50] sm:$0xff] 0.0
          %366 = vst [vmem:[%s348 + $0x58] sm:$0xff] 0.0
          %367 = vst [vmem:[%s348 + $0x60] sm:$0xff] 0.0
          %368 = vst [vmem:[%s348 + $0x68] sm:$0xff] 0.0
          %369 = vst [vmem:[%s348 + $0x70] sm:$0xff] 0.0
          %370 = vst [vmem:[%s348 + $0x78] sm:$0xff] 0.0
          %371 = vst [vmem:[%s348 + $0x80] sm:$0xff] 0.0
          %372 = vst [vmem:[%s348 + $0x88] sm:$0xff] 0.0
          %373 = vst [vmem:[%s348 + $0x90] sm:$0xff] 0.0
          %374 = vst [vmem:[%s348 + $0x98] sm:$0xff] 0.0
          %375 = vst [vmem:[%s348 + $0xa0] sm:$0xff] 0.0
          %376 = vst [vmem:[%s348 + $0xa8] sm:$0xff] 0.0
          %377 = vst [vmem:[%s348 + $0xb0] sm:$0xff] 0.0
          %378 = vst [vmem:[%s348 + $0xb8] sm:$0xff] 0.0
          %379 = vst [vmem:[%s348 + $0xc0] sm:$0xff] 0.0
          %380 = vst [vmem:[%s348 + $0xc8] sm:$0xff] 0.0
          %381 = vst [vmem:[%s348 + $0xd0] sm:$0xff] 0.0
          %382 = vst [vmem:[%s348 + $0xd8] sm:$0xff] 0.0
          %383 = vst [vmem:[%s348 + $0xe0] sm:$0xff] 0.0
          %384 = vst [vmem:[%s348 + $0xe8] sm:$0xff] 0.0
          %385 = vst [vmem:[%s348 + $0xf0] sm:$0xff] 0.0
          %386 = vst [vmem:[%s348 + $0xf8] sm:$0xff] 0.0
        $region74: #{graph_convolution.3} parent=65 // pred_fallthru
          _
        %s387 = smul.u32 %s19, 256
        %s388 = sshra.s32 %s387, 3
        %s389 = sand.u32 %s387, 7
        %s390 = smul.addr %s388, 4
        %s391 = scalar_lea.vmem %s1, %s390
        %v392 = vld [vmem:[%s391] sm:$0xf]
        %v393 = vld [vmem:[%s391 + $0x4] sm:$0xf]
        %v394 = vld [vmem:[%s391 + $0x8] sm:$0xf]
        %v395 = vld [vmem:[%s391 + $0xc] sm:$0xf]
        %v396 = vld [vmem:[%s391 + $0x10] sm:$0xf]
        %v397 = vld [vmem:[%s391 + $0x14] sm:$0xf]
        %v398 = vld [vmem:[%s391 + $0x18] sm:$0xf]
        %v399 = vld [vmem:[%s391 + $0x1c] sm:$0xf]
        %v400 = vld [vmem:[%s391 + $0x20] sm:$0xf]
        %v401 = vld [vmem:[%s391 + $0x24] sm:$0xf]
        %v402 = vld [vmem:[%s391 + $0x28] sm:$0xf]
        %v403 = vld [vmem:[%s391 + $0x2c] sm:$0xf]
        %v404 = vld [vmem:[%s391 + $0x30] sm:$0xf]
        %v405 = vld [vmem:[%s391 + $0x34] sm:$0xf]
        %v406 = vld [vmem:[%s391 + $0x38] sm:$0xf]
        %v407 = vld [vmem:[%s391 + $0x3c] sm:$0xf]
        %v408 = vld [vmem:[%s391 + $0x40] sm:$0xf]
        %v409 = vld [vmem:[%s391 + $0x44] sm:$0xf]
        %v410 = vld [vmem:[%s391 + $0x48] sm:$0xf]
        %v411 = vld [vmem:[%s391 + $0x4c] sm:$0xf]
        %v412 = vld [vmem:[%s391 + $0x50] sm:$0xf]
        %v413 = vld [vmem:[%s391 + $0x54] sm:$0xf]
        %v414 = vld [vmem:[%s391 + $0x58] sm:$0xf]
        %v415 = vld [vmem:[%s391 + $0x5c] sm:$0xf]
        %v416 = vld [vmem:[%s391 + $0x60] sm:$0xf]
        %v417 = vld [vmem:[%s391 + $0x64] sm:$0xf]
        %v418 = vld [vmem:[%s391 + $0x68] sm:$0xf]
        %v419 = vld [vmem:[%s391 + $0x6c] sm:$0xf]
        %v420 = vld [vmem:[%s391 + $0x70] sm:$0xf]
        %v421 = vld [vmem:[%s391 + $0x74] sm:$0xf]
        %v422 = vld [vmem:[%s391 + $0x78] sm:$0xf]
        %v423 = vld [vmem:[%s391 + $0x7c] sm:$0xf]
        %v424 = vld [vmem:[%s348] sm:$0xff]
        %v425 = vld [vmem:[%s348 + $0x8] sm:$0xff]
        %v426 = vld [vmem:[%s348 + $0x10] sm:$0xff]
        %v427 = vld [vmem:[%s348 + $0x18] sm:$0xff]
        %v428 = vld [vmem:[%s348 + $0x20] sm:$0xff]
        %v429 = vld [vmem:[%s348 + $0x28] sm:$0xff]
        %v430 = vld [vmem:[%s348 + $0x30] sm:$0xff]
        %v431 = vld [vmem:[%s348 + $0x38] sm:$0xff]
        %v432 = vld [vmem:[%s348 + $0x40] sm:$0xff]
        %v433 = vld [vmem:[%s348 + $0x48] sm:$0xff]
        %v434 = vld [vmem:[%s348 + $0x50] sm:$0xff]
        %v435 = vld [vmem:[%s348 + $0x58] sm:$0xff]
        %v436 = vld [vmem:[%s348 + $0x60] sm:$0xff]
        %v437 = vld [vmem:[%s348 + $0x68] sm:$0xff]
        %v438 = vld [vmem:[%s348 + $0x70] sm:$0xff]
        %v439 = vld [vmem:[%s348 + $0x78] sm:$0xff]
        %v440 = vld [vmem:[%s348 + $0x80] sm:$0xff]
        %v441 = vld [vmem:[%s348 + $0x88] sm:$0xff]
        %v442 = vld [vmem:[%s348 + $0x90] sm:$0xff]
        %v443 = vld [vmem:[%s348 + $0x98] sm:$0xff]
        %v444 = vld [vmem:[%s348 + $0xa0] sm:$0xff]
        %v445 = vld [vmem:[%s348 + $0xa8] sm:$0xff]
        %v446 = vld [vmem:[%s348 + $0xb0] sm:$0xff]
        %v447 = vld [vmem:[%s348 + $0xb8] sm:$0xff]
        %v448 = vld [vmem:[%s348 + $0xc0] sm:$0xff]
        %v449 = vld [vmem:[%s348 + $0xc8] sm:$0xff]
        %v450 = vld [vmem:[%s348 + $0xd0] sm:$0xff]
        %v451 = vld [vmem:[%s348 + $0xd8] sm:$0xff]
        %v452 = vld [vmem:[%s348 + $0xe0] sm:$0xff]
        %v453 = vld [vmem:[%s348 + $0xe8] sm:$0xff]
        %v454 = vld [vmem:[%s348 + $0xf0] sm:$0xff]
        %v455 = vld [vmem:[%s348 + $0xf8] sm:$0xff]
        %v456 = vld [vmem:[%s321] sm:$0xff]
        %v457 = vld [vmem:[%s321 + $0x8] sm:$0xff]
        %v458 = vld [vmem:[%s321 + $0x10] sm:$0xff]
        %v459 = vld [vmem:[%s321 + $0x18] sm:$0xff]
        %v460 = vld [vmem:[%s321 + $0x20] sm:$0xff]
        %v461 = vld [vmem:[%s321 + $0x28] sm:$0xff]
        %v462 = vld [vmem:[%s321 + $0x30] sm:$0xff]
        %v463 = vld [vmem:[%s321 + $0x38] sm:$0xff]
        %v464 = vld [vmem:[%s321 + $0x40] sm:$0xff]
        %v465 = vld [vmem:[%s321 + $0x48] sm:$0xff]
        %v466 = vld [vmem:[%s321 + $0x50] sm:$0xff]
        %v467 = vld [vmem:[%s321 + $0x58] sm:$0xff]
        %v468 = vld [vmem:[%s321 + $0x60] sm:$0xff]
        %v469 = vld [vmem:[%s321 + $0x68] sm:$0xff]
        %v470 = vld [vmem:[%s321 + $0x70] sm:$0xff]
        %v471 = vld [vmem:[%s321 + $0x78] sm:$0xff]
        %v472 = vld [vmem:[%s321 + $0x80] sm:$0xff]
        %v473 = vld [vmem:[%s321 + $0x88] sm:$0xff]
        %v474 = vld [vmem:[%s321 + $0x90] sm:$0xff]
        %v475 = vld [vmem:[%s321 + $0x98] sm:$0xff]
        %v476 = vld [vmem:[%s321 + $0xa0] sm:$0xff]
        %v477 = vld [vmem:[%s321 + $0xa8] sm:$0xff]
        %v478 = vld [vmem:[%s321 + $0xb0] sm:$0xff]
        %v479 = vld [vmem:[%s321 + $0xb8] sm:$0xff]
        %v480 = vld [vmem:[%s321 + $0xc0] sm:$0xff]
        %v481 = vld [vmem:[%s321 + $0xc8] sm:$0xff]
        %v482 = vld [vmem:[%s321 + $0xd0] sm:$0xff]
        %v483 = vld [vmem:[%s321 + $0xd8] sm:$0xff]
        %v484 = vld [vmem:[%s321 + $0xe0] sm:$0xff]
        %v485 = vld [vmem:[%s321 + $0xe8] sm:$0xff]
        %v486 = vld [vmem:[%s321 + $0xf0] sm:$0xff]
        %v487 = vld [vmem:[%s321 + $0xf8] sm:$0xff]
        %v520 = vunpack.c.l.b16 %v456
        %v521 = vunpack.c.h.b16 %v456
        %v522 = vunpack.c.l.b16 %v457
        %v523 = vunpack.c.h.b16 %v457
        %v524 = vunpack.c.l.b16 %v458
        %v525 = vunpack.c.h.b16 %v458
        %v526 = vunpack.c.l.b16 %v459
        %v527 = vunpack.c.h.b16 %v459
        %v528 = vunpack.c.l.b16 %v460
        %v529 = vunpack.c.h.b16 %v460
        %v530 = vunpack.c.l.b16 %v461
        %v531 = vunpack.c.h.b16 %v461
        %v532 = vunpack.c.l.b16 %v462
        %v533 = vunpack.c.h.b16 %v462
        %v534 = vunpack.c.l.b16 %v463
        %v535 = vunpack.c.h.b16 %v463
        %v536 = vunpack.c.l.b16 %v464
        %v537 = vunpack.c.h.b16 %v464
        %v538 = vunpack.c.l.b16 %v465
        %v539 = vunpack.c.h.b16 %v465
        %v540 = vunpack.c.l.b16 %v466
        %v541 = vunpack.c.h.b16 %v466
        %v542 = vunpack.c.l.b16 %v467
        %v543 = vunpack.c.h.b16 %v467
        %v544 = vunpack.c.l.b16 %v468
        %v545 = vunpack.c.h.b16 %v468
        %v546 = vunpack.c.l.b16 %v469
        %v547 = vunpack.c.h.b16 %v469
        %v548 = vunpack.c.l.b16 %v470
        %v549 = vunpack.c.h.b16 %v470
        %v550 = vunpack.c.l.b16 %v471
        %v551 = vunpack.c.h.b16 %v471
        %v552 = vunpack.c.l.b16 %v472
        %v553 = vunpack.c.h.b16 %v472
        %v554 = vunpack.c.l.b16 %v473
        %v555 = vunpack.c.h.b16 %v473
        %v556 = vunpack.c.l.b16 %v474
        %v557 = vunpack.c.h.b16 %v474
        %v558 = vunpack.c.l.b16 %v475
        %v559 = vunpack.c.h.b16 %v475
        %v560 = vunpack.c.l.b16 %v476
        %v561 = vunpack.c.h.b16 %v476
        %v562 = vunpack.c.l.b16 %v477
        %v563 = vunpack.c.h.b16 %v477
        %v564 = vunpack.c.l.b16 %v478
        %v565 = vunpack.c.h.b16 %v478
        %v566 = vunpack.c.l.b16 %v479
        %v567 = vunpack.c.h.b16 %v479
        %v568 = vunpack.c.l.b16 %v480
        %v569 = vunpack.c.h.b16 %v480
        %v570 = vunpack.c.l.b16 %v481
        %v571 = vunpack.c.h.b16 %v481
        %v572 = vunpack.c.l.b16 %v482
        %v573 = vunpack.c.h.b16 %v482
        %v574 = vunpack.c.l.b16 %v483
        %v575 = vunpack.c.h.b16 %v483
        %v576 = vunpack.c.l.b16 %v484
        %v577 = vunpack.c.h.b16 %v484
        %v578 = vunpack.c.l.b16 %v485
        %v579 = vunpack.c.h.b16 %v485
        %v580 = vunpack.c.l.b16 %v486
        %v581 = vunpack.c.h.b16 %v486
        %v582 = vunpack.c.l.b16 %v487
        %v583 = vunpack.c.h.b16 %v487
        %v584 = vpack.c.b16 %v522, %v520
        %v585 = vpack.c.b16 %v523, %v521
        %v586 = vpack.c.b16 %v526, %v524
        %v587 = vpack.c.b16 %v527, %v525
        %v588 = vpack.c.b16 %v530, %v528
        %v589 = vpack.c.b16 %v531, %v529
        %v590 = vpack.c.b16 %v534, %v532
        %v591 = vpack.c.b16 %v535, %v533
        %v592 = vpack.c.b16 %v538, %v536
        %v593 = vpack.c.b16 %v539, %v537
        %v594 = vpack.c.b16 %v542, %v540
        %v595 = vpack.c.b16 %v543, %v541
        %v596 = vpack.c.b16 %v546, %v544
        %v597 = vpack.c.b16 %v547, %v545
        %v598 = vpack.c.b16 %v550, %v548
        %v599 = vpack.c.b16 %v551, %v549
        %v600 = vpack.c.b16 %v554, %v552
        %v601 = vpack.c.b16 %v555, %v553
        %v602 = vpack.c.b16 %v558, %v556
        %v603 = vpack.c.b16 %v559, %v557
        %v604 = vpack.c.b16 %v562, %v560
        %v605 = vpack.c.b16 %v563, %v561
        %v606 = vpack.c.b16 %v566, %v564
        %v607 = vpack.c.b16 %v567, %v565
        %v608 = vpack.c.b16 %v570, %v568
        %v609 = vpack.c.b16 %v571, %v569
        %v610 = vpack.c.b16 %v574, %v572
        %v611 = vpack.c.b16 %v575, %v573
        %v612 = vpack.c.b16 %v578, %v576
        %v613 = vpack.c.b16 %v579, %v577
        %v614 = vpack.c.b16 %v582, %v580
        %v615 = vpack.c.b16 %v583, %v581
        %v680 = vunpack.c.l.b16 %v392
        %v681 = vunpack.c.l.b16 %v393
        %v682 = vunpack.c.l.b16 %v394
        %v683 = vunpack.c.l.b16 %v395
        %v684 = vunpack.c.l.b16 %v396
        %v685 = vunpack.c.l.b16 %v397
        %v686 = vunpack.c.l.b16 %v398
        %v687 = vunpack.c.l.b16 %v399
        %v688 = vunpack.c.l.b16 %v400
        %v689 = vunpack.c.l.b16 %v401
        %v690 = vunpack.c.l.b16 %v402
        %v691 = vunpack.c.l.b16 %v403
        %v692 = vunpack.c.l.b16 %v404
        %v693 = vunpack.c.l.b16 %v405
        %v694 = vunpack.c.l.b16 %v406
        %v695 = vunpack.c.l.b16 %v407
        %v696 = vunpack.c.l.b16 %v408
        %v697 = vunpack.c.l.b16 %v409
        %v698 = vunpack.c.l.b16 %v410
        %v699 = vunpack.c.l.b16 %v411
        %v700 = vunpack.c.l.b16 %v412
        %v701 = vunpack.c.l.b16 %v413
        %v702 = vunpack.c.l.b16 %v414
        %v703 = vunpack.c.l.b16 %v415
        %v704 = vunpack.c.l.b16 %v416
        %v705 = vunpack.c.l.b16 %v417
        %v706 = vunpack.c.l.b16 %v418
        %v707 = vunpack.c.l.b16 %v419
        %v708 = vunpack.c.l.b16 %v420
        %v709 = vunpack.c.l.b16 %v421
        %v710 = vunpack.c.l.b16 %v422
        %v711 = vunpack.c.l.b16 %v423
        %v712 = vpack.c.b16 %v681, %v680
        %v713 = vpack.c.b16 %v683, %v682
        %v714 = vpack.c.b16 %v685, %v684
        %v715 = vpack.c.b16 %v687, %v686
        %v716 = vpack.c.b16 %v689, %v688
        %v717 = vpack.c.b16 %v691, %v690
        %v718 = vpack.c.b16 %v693, %v692
        %v719 = vpack.c.b16 %v695, %v694
        %v720 = vpack.c.b16 %v697, %v696
        %v721 = vpack.c.b16 %v699, %v698
        %v722 = vpack.c.b16 %v701, %v700
        %v723 = vpack.c.b16 %v703, %v702
        %v724 = vpack.c.b16 %v705, %v704
        %v725 = vpack.c.b16 %v707, %v706
        %v726 = vpack.c.b16 %v709, %v708
        %v727 = vpack.c.b16 %v711, %v710
        %744 = vmatprep.subr.bf16.mxu0 0
        %745 = vmatpush1.bf16.msra.mxu0 %v712
        %746 = vmatprep.subr.bf16.mxu0 0
        %747 = vmatpush1.bf16.msra.mxu0 %v713
        %748 = vmatprep.subr.bf16.mxu0 0
        %749 = vmatpush1.bf16.msra.mxu0 %v714
        %750 = vmatprep.subr.bf16.mxu0 0
        %751 = vmatpush1.bf16.msra.mxu0 %v715
        %752 = vmatprep.subr.bf16.mxu0 0
        %753 = vmatpush1.bf16.msra.mxu0 %v716
        %754 = vmatprep.subr.bf16.mxu0 0
        %755 = vmatpush1.bf16.msra.mxu0 %v717
        %756 = vmatprep.subr.bf16.mxu0 0
        %757 = vmatpush1.bf16.msra.mxu0 %v718
        %758 = vmatprep.subr.bf16.mxu0 0
        %759 = vmatpush1.bf16.msra.mxu0 %v719
        %760 = vmatprep.subr.bf16.mxu0 0
        %761 = vmatpush1.bf16.msra.mxu0 %v720
        %762 = vmatprep.subr.bf16.mxu0 0
        %763 = vmatpush1.bf16.msra.mxu0 %v721
        %764 = vmatprep.subr.bf16.mxu0 0
        %765 = vmatpush1.bf16.msra.mxu0 %v722
        %766 = vmatprep.subr.bf16.mxu0 0
        %767 = vmatpush1.bf16.msra.mxu0 %v723
        %768 = vmatprep.subr.bf16.mxu0 0
        %769 = vmatpush1.bf16.msra.mxu0 %v724
        %770 = vmatprep.subr.bf16.mxu0 0
        %771 = vmatpush1.bf16.msra.mxu0 %v725
        %772 = vmatprep.subr.bf16.mxu0 0
        %773 = vmatpush1.bf16.msra.mxu0 %v726
        %774 = vmatprep.subr.bf16.mxu0 0
        %775 = vmatpush1.bf16.msra.mxu0 %v727
        %776 = vmatprep.mubr.bf16.mxu0 %v585
        %777 = vmatmul.mubr.bf16.gmra.mrb[0].mxu0 %v584
        %v778 = vpop.f32.mrb[0].mxu0
        %v779 = vadd.f32 0.0, %v778
        %v780 = vpop.f32.mrb[0].mxu0
        %v781 = vpop.f32.mrb[0].mxu0
        %v782 = vadd.f32 0.0, %v781
        %v783 = vpop.f32.mrb[0].mxu0
        %784 = vmatprep.mubr.bf16.mxu0 %v587
        %785 = vmatmul.mubr.bf16.gmra.mrb[0].mxu0 %v586
        %v786 = vpop.f32.mrb[0].mxu0
        %v787 = vadd.f32 0.0, %v786
        %v788 = vpop.f32.mrb[0].mxu0
        %v789 = vpop.f32.mrb[0].mxu0
        %v790 = vadd.f32 0.0, %v789
        %v791 = vpop.f32.mrb[0].mxu0
        %792 = vmatprep.mubr.bf16.mxu0 %v589
        %793 = vmatmul.mubr.bf16.gmra.mrb[0].mxu0 %v588
        %v794 = vpop.f32.mrb[0].mxu0
        %v795 = vadd.f32 0.0, %v794
        %v796 = vpop.f32.mrb[0].mxu0
        %v797 = vpop.f32.mrb[0].mxu0
        %v798 = vadd.f32 0.0, %v797
        %v799 = vpop.f32.mrb[0].mxu0
        %800 = vmatprep.mubr.bf16.mxu0 %v591
        %801 = vmatmul.mubr.bf16.gmra.mrb[0].mxu0 %v590
        %v802 = vpop.f32.mrb[0].mxu0
        %v803 = vadd.f32 0.0, %v802
        %v804 = vpop.f32.mrb[0].mxu0
        %v805 = vpop.f32.mrb[0].mxu0
        %v806 = vadd.f32 0.0, %v805
        %v807 = vpop.f32.mrb[0].mxu0
        %808 = vmatprep.mubr.bf16.mxu0 %v593
        %809 = vmatmul.mubr.bf16.gmra.mrb[0].mxu0 %v592
        %v810 = vpop.f32.mrb[0].mxu0
        %v811 = vadd.f32 0.0, %v810
        %v812 = vpop.f32.mrb[0].mxu0
        %v813 = vpop.f32.mrb[0].mxu0
        %v814 = vadd.f32 0.0, %v813
        %v815 = vpop.f32.mrb[0].mxu0
        %816 = vmatprep.mubr.bf16.mxu0 %v595
        %817 = vmatmul.mubr.bf16.gmra.mrb[0].mxu0 %v594
        %v818 = vpop.f32.mrb[0].mxu0
        %v819 = vadd.f32 0.0, %v818
        %v820 = vpop.f32.mrb[0].mxu0
        %v821 = vpop.f32.mrb[0].mxu0
        %v822 = vadd.f32 0.0, %v821
        %v823 = vpop.f32.mrb[0].mxu0
        %824 = vmatprep.mubr.bf16.mxu0 %v597
        %825 = vmatmul.mubr.bf16.gmra.mrb[0].mxu0 %v596
        %v826 = vpop.f32.mrb[0].mxu0
        %v827 = vadd.f32 0.0, %v826
        %v828 = vpop.f32.mrb[0].mxu0
        %v829 = vpop.f32.mrb[0].mxu0
        %v830 = vadd.f32 0.0, %v829
        %v831 = vpop.f32.mrb[0].mxu0
        %832 = vmatprep.mubr.bf16.mxu0 %v599
        %833 = vmatmul.mubr.bf16.gmra.mrb[0].mxu0 %v598
        %v834 = vpop.f32.mrb[0].mxu0
        %v835 = vadd.f32 0.0, %v834
        %v836 = vpop.f32.mrb[0].mxu0
        %v837 = vpop.f32.mrb[0].mxu0
        %v838 = vadd.f32 0.0, %v837
        %v839 = vpop.f32.mrb[0].mxu0
        %840 = vmatprep.mubr.bf16.mxu0 %v601
        %841 = vmatmul.mubr.bf16.gmra.mrb[0].mxu0 %v600
        %v842 = vpop.f32.mrb[0].mxu0
        %v843 = vadd.f32 0.0, %v842
        %v844 = vpop.f32.mrb[0].mxu0
        %v845 = vpop.f32.mrb[0].mxu0
        %v846 = vadd.f32 0.0, %v845
        %v847 = vpop.f32.mrb[0].mxu0
        %848 = vmatprep.mubr.bf16.mxu0 %v603
        %849 = vmatmul.mubr.bf16.gmra.mrb[0].mxu0 %v602
        %v850 = vpop.f32.mrb[0].mxu0
        %v851 = vadd.f32 0.0, %v850
        %v852 = vpop.f32.mrb[0].mxu0
        %v853 = vpop.f32.mrb[0].mxu0
        %v854 = vadd.f32 0.0, %v853
        %v855 = vpop.f32.mrb[0].mxu0
        %856 = vmatprep.mubr.bf16.mxu0 %v605
        %857 = vmatmul.mubr.bf16.gmra.mrb[0].mxu0 %v604
        %v858 = vpop.f32.mrb[0].mxu0
        %v859 = vadd.f32 0.0, %v858
        %v860 = vpop.f32.mrb[0].mxu0
        %v861 = vpop.f32.mrb[0].mxu0
        %v862 = vadd.f32 0.0, %v861
        %v863 = vpop.f32.mrb[0].mxu0
        %864 = vmatprep.mubr.bf16.mxu0 %v607
        %865 = vmatmul.mubr.bf16.gmra.mrb[0].mxu0 %v606
        %v866 = vpop.f32.mrb[0].mxu0
        %v867 = vadd.f32 0.0, %v866
        %v868 = vpop.f32.mrb[0].mxu0
        %v869 = vpop.f32.mrb[0].mxu0
        %v870 = vadd.f32 0.0, %v869
        %v871 = vpop.f32.mrb[0].mxu0
        %872 = vmatprep.mubr.bf16.mxu0 %v609
        %873 = vmatmul.mubr.bf16.gmra.mrb[0].mxu0 %v608
        %v874 = vpop.f32.mrb[0].mxu0
        %v875 = vadd.f32 0.0, %v874
        %v876 = vpop.f32.mrb[0].mxu0
        %v877 = vpop.f32.mrb[0].mxu0
        %v878 = vadd.f32 0.0, %v877
        %v879 = vpop.f32.mrb[0].mxu0
        %880 = vmatprep.mubr.bf16.mxu0 %v611
        %881 = vmatmul.mubr.bf16.gmra.mrb[0].mxu0 %v610
        %v882 = vpop.f32.mrb[0].mxu0
        %v883 = vadd.f32 0.0, %v882
        %v884 = vpop.f32.mrb[0].mxu0
        %v885 = vpop.f32.mrb[0].mxu0
        %v886 = vadd.f32 0.0, %v885
        %v887 = vpop.f32.mrb[0].mxu0
        %888 = vmatprep.mubr.bf16.mxu0 %v613
        %889 = vmatmul.mubr.bf16.gmra.mrb[0].mxu0 %v612
        %v890 = vpop.f32.mrb[0].mxu0
        %v891 = vadd.f32 0.0, %v890
        %v892 = vpop.f32.mrb[0].mxu0
        %v893 = vpop.f32.mrb[0].mxu0
        %v894 = vadd.f32 0.0, %v893
        %v895 = vpop.f32.mrb[0].mxu0
        %896 = vmatprep.mubr.bf16.mxu0 %v615
        %897 = vmatmul.mubr.bf16.gmra.mrb[0].mxu0 %v614
        %v898 = vpop.f32.mrb[0].mxu0
        %v899 = vadd.f32 0.0, %v898
        %v900 = vpop.f32.mrb[0].mxu0
        %v901 = vpop.f32.mrb[0].mxu0
        %v902 = vadd.f32 0.0, %v901
        %v903 = vpop.f32.mrb[0].mxu0
        %904 = vdwg.mxu0
        %v905 = vadd.f32 %v424, %v779
        %v906 = vadd.f32 %v425, %v782
        %v907 = vadd.f32 %v426, %v787
        %v908 = vadd.f32 %v427, %v790
        %v909 = vadd.f32 %v428, %v795
        %v910 = vadd.f32 %v429, %v798
        %v911 = vadd.f32 %v430, %v803
        %v912 = vadd.f32 %v431, %v806
        %v913 = vadd.f32 %v432, %v811
        %v914 = vadd.f32 %v433, %v814
        %v915 = vadd.f32 %v434, %v819
        %v916 = vadd.f32 %v435, %v822
        %v917 = vadd.f32 %v436, %v827
        %v918 = vadd.f32 %v437, %v830
        %v919 = vadd.f32 %v438, %v835
        %v920 = vadd.f32 %v439, %v838
        %v921 = vadd.f32 %v440, %v843
        %v922 = vadd.f32 %v441, %v846
        %v923 = vadd.f32 %v442, %v851
        %v924 = vadd.f32 %v443, %v854
        %v925 = vadd.f32 %v444, %v859
        %v926 = vadd.f32 %v445, %v862
        %v927 = vadd.f32 %v446, %v867
        %v928 = vadd.f32 %v447, %v870
        %v929 = vadd.f32 %v448, %v875
        %v930 = vadd.f32 %v449, %v878
        %v931 = vadd.f32 %v450, %v883
        %v932 = vadd.f32 %v451, %v886
        %v933 = vadd.f32 %v452, %v891
        %v934 = vadd.f32 %v453, %v894
        %v935 = vadd.f32 %v454, %v899
        %v936 = vadd.f32 %v455, %v902
        %937 = vst [vmem:[%s348] sm:$0xff] %v905
        %938 = vst [vmem:[%s348 + $0x8] sm:$0xff] %v906
        %939 = vst [vmem:[%s348 + $0x10] sm:$0xff] %v907
        %940 = vst [vmem:[%s348 + $0x18] sm:$0xff] %v908
        %941 = vst [vmem:[%s348 + $0x20] sm:$0xff] %v909
        %942 = vst [vmem:[%s348 + $0x28] sm:$0xff] %v910
        %943 = vst [vmem:[%s348 + $0x30] sm:$0xff] %v911
        %944 = vst [vmem:[%s348 + $0x38] sm:$0xff] %v912
        %945 = vst [vmem:[%s348 + $0x40] sm:$0xff] %v913
        %946 = vst [vmem:[%s348 + $0x48] sm:$0xff] %v914
        %947 = vst [vmem:[%s348 + $0x50] sm:$0xff] %v915
        %948 = vst [vmem:[%s348 + $0x58] sm:$0xff] %v916
        %949 = vst [vmem:[%s348 + $0x60] sm:$0xff] %v917
        %950 = vst [vmem:[%s348 + $0x68] sm:$0xff] %v918
        %951 = vst [vmem:[%s348 + $0x70] sm:$0xff] %v919
        %952 = vst [vmem:[%s348 + $0x78] sm:$0xff] %v920
        %953 = vst [vmem:[%s348 + $0x80] sm:$0xff] %v921
        %954 = vst [vmem:[%s348 + $0x88] sm:$0xff] %v922
        %955 = vst [vmem:[%s348 + $0x90] sm:$0xff] %v923
        %956 = vst [vmem:[%s348 + $0x98] sm:$0xff] %v924
        %957 = vst [vmem:[%s348 + $0xa0] sm:$0xff] %v925
        %958 = vst [vmem:[%s348 + $0xa8] sm:$0xff] %v926
        %959 = vst [vmem:[%s348 + $0xb0] sm:$0xff] %v927
        %960 = vst [vmem:[%s348 + $0xb8] sm:$0xff] %v928
        %961 = vst [vmem:[%s348 + $0xc0] sm:$0xff] %v929
        %962 = vst [vmem:[%s348 + $0xc8] sm:$0xff] %v930
        %963 = vst [vmem:[%s348 + $0xd0] sm:$0xff] %v931
        %964 = vst [vmem:[%s348 + $0xd8] sm:$0xff] %v932
        %965 = vst [vmem:[%s348 + $0xe0] sm:$0xff] %v933
        %966 = vst [vmem:[%s348 + $0xe8] sm:$0xff] %v934
        %967 = vst [vmem:[%s348 + $0xf0] sm:$0xff] %v935
        %968 = vst [vmem:[%s348 + $0xf8] sm:$0xff] %v936
        %p969 = scmp.eq.s32.totalorder %s19, 1
        // Predicated region
        $region75: #{graph_convolution.3} parent=65 // pred_check
          %p970 = pneg %p969
        $region76: #{graph_convolution.3} parent=65 // pred_check_branch
          %972 = sbr.rel (%p970) target = $region78
        $region77: #{graph_convolution.3} parent=65 // pred_region
          %v973 = vld [vmem:[%s348] sm:$0xff]
          %v974 = vld [vmem:[%s348 + $0x8] sm:$0xff]
          %v975 = vld [vmem:[%s348 + $0x10] sm:$0xff]
          %v976 = vld [vmem:[%s348 + $0x18] sm:$0xff]
          %v977 = vld [vmem:[%s348 + $0x20] sm:$0xff]
          %v978 = vld [vmem:[%s348 + $0x28] sm:$0xff]
          %v979 = vld [vmem:[%s348 + $0x30] sm:$0xff]
          %v980 = vld [vmem:[%s348 + $0x38] sm:$0xff]
          %v981 = vld [vmem:[%s348 + $0x40] sm:$0xff]
          %v982 = vld [vmem:[%s348 + $0x48] sm:$0xff]
          %v983 = vld [vmem:[%s348 + $0x50] sm:$0xff]
          %v984 = vld [vmem:[%s348 + $0x58] sm:$0xff]
          %v985 = vld [vmem:[%s348 + $0x60] sm:$0xff]
          %v986 = vld [vmem:[%s348 + $0x68] sm:$0xff]
          %v987 = vld [vmem:[%s348 + $0x70] sm:$0xff]
          %v988 = vld [vmem:[%s348 + $0x78] sm:$0xff]
          %v989 = vld [vmem:[%s348 + $0x80] sm:$0xff]
          %v990 = vld [vmem:[%s348 + $0x88] sm:$0xff]
          %v991 = vld [vmem:[%s348 + $0x90] sm:$0xff]
          %v992 = vld [vmem:[%s348 + $0x98] sm:$0xff]
          %v993 = vld [vmem:[%s348 + $0xa0] sm:$0xff]
          %v994 = vld [vmem:[%s348 + $0xa8] sm:$0xff]
          %v995 = vld [vmem:[%s348 + $0xb0] sm:$0xff]
          %v996 = vld [vmem:[%s348 + $0xb8] sm:$0xff]
          %v997 = vld [vmem:[%s348 + $0xc0] sm:$0xff]
          %v998 = vld [vmem:[%s348 + $0xc8] sm:$0xff]
          %v999 = vld [vmem:[%s348 + $0xd0] sm:$0xff]
          %v1000 = vld [vmem:[%s348 + $0xd8] sm:$0xff]
          %v1001 = vld [vmem:[%s348 + $0xe0] sm:$0xff]
          %v1002 = vld [vmem:[%s348 + $0xe8] sm:$0xff]
          %v1003 = vld [vmem:[%s348 + $0xf0] sm:$0xff]
          %v1004 = vld [vmem:[%s348 + $0xf8] sm:$0xff]
          %v1005 = vld [vmem:[%s2] sm:$0x1]
          %v1007 = vlaneseq
          %v1008 = vshrl.u32 %v1007, 7
          %v1009 = vsub.s32 0, %v1008
          %v1010 = vrot.slane %v1005, %v1009
          %v1012 = vadd.f32 %v973, %v1010
          %v1013 = vadd.f32 %v974, %v1010
          %v1014 = vadd.f32 %v975, %v1010
          %v1015 = vadd.f32 %v976, %v1010
          %v1016 = vadd.f32 %v977, %v1010
          %v1017 = vadd.f32 %v978, %v1010
          %v1018 = vadd.f32 %v979, %v1010
          %v1019 = vadd.f32 %v980, %v1010
          %v1020 = vadd.f32 %v981, %v1010
          %v1021 = vadd.f32 %v982, %v1010
          %v1022 = vadd.f32 %v983, %v1010
          %v1023 = vadd.f32 %v984, %v1010
          %v1024 = vadd.f32 %v985, %v1010
          %v1025 = vadd.f32 %v986, %v1010
          %v1026 = vadd.f32 %v987, %v1010
          %v1027 = vadd.f32 %v988, %v1010
          %v1028 = vadd.f32 %v989, %v1010
          %v1029 = vadd.f32 %v990, %v1010
          %v1030 = vadd.f32 %v991, %v1010
          %v1031 = vadd.f32 %v992, %v1010
          %v1032 = vadd.f32 %v993, %v1010
          %v1033 = vadd.f32 %v994, %v1010
          %v1034 = vadd.f32 %v995, %v1010
          %v1035 = vadd.f32 %v996, %v1010
          %v1036 = vadd.f32 %v997, %v1010
          %v1037 = vadd.f32 %v998, %v1010
          %v1038 = vadd.f32 %v999, %v1010
          %v1039 = vadd.f32 %v1000, %v1010
          %v1040 = vadd.f32 %v1001, %v1010
          %v1041 = vadd.f32 %v1002, %v1010
          %v1042 = vadd.f32 %v1003, %v1010
          %v1043 = vadd.f32 %v1004, %v1010
          %v1044 = vmax.f32 %v1012, 0.0
          %v1045 = vmax.f32 %v1013, 0.0
          %v1046 = vmax.f32 %v1014, 0.0
          %v1047 = vmax.f32 %v1015, 0.0
          %v1048 = vmax.f32 %v1016, 0.0
          %v1049 = vmax.f32 %v1017, 0.0
          %v1050 = vmax.f32 %v1018, 0.0
          %v1051 = vmax.f32 %v1019, 0.0
          %v1052 = vmax.f32 %v1020, 0.0
          %v1053 = vmax.f32 %v1021, 0.0
          %v1054 = vmax.f32 %v1022, 0.0
          %v1055 = vmax.f32 %v1023, 0.0
          %v1056 = vmax.f32 %v1024, 0.0
          %v1057 = vmax.f32 %v1025, 0.0
          %v1058 = vmax.f32 %v1026, 0.0
          %v1059 = vmax.f32 %v1027, 0.0
          %v1060 = vmax.f32 %v1028, 0.0
          %v1061 = vmax.f32 %v1029, 0.0
          %v1062 = vmax.f32 %v1030, 0.0
          %v1063 = vmax.f32 %v1031, 0.0
          %v1064 = vmax.f32 %v1032, 0.0
          %v1065 = vmax.f32 %v1033, 0.0
          %v1066 = vmax.f32 %v1034, 0.0
          %v1067 = vmax.f32 %v1035, 0.0
          %v1068 = vmax.f32 %v1036, 0.0
          %v1069 = vmax.f32 %v1037, 0.0
          %v1070 = vmax.f32 %v1038, 0.0
          %v1071 = vmax.f32 %v1039, 0.0
          %v1072 = vmax.f32 %v1040, 0.0
          %v1073 = vmax.f32 %v1041, 0.0
          %v1074 = vmax.f32 %v1042, 0.0
          %v1075 = vmax.f32 %v1043, 0.0
          %1076 = vst [vmem:[%s348] sm:$0xff] %v1044
          %1077 = vst [vmem:[%s348 + $0x8] sm:$0xff] %v1045
          %1078 = vst [vmem:[%s348 + $0x10] sm:$0xff] %v1046
          %1079 = vst [vmem:[%s348 + $0x18] sm:$0xff] %v1047
          %1080 = vst [vmem:[%s348 + $0x20] sm:$0xff] %v1048
          %1081 = vst [vmem:[%s348 + $0x28] sm:$0xff] %v1049
          %1082 = vst [vmem:[%s348 + $0x30] sm:$0xff] %v1050
          %1083 = vst [vmem:[%s348 + $0x38] sm:$0xff] %v1051
          %1084 = vst [vmem:[%s348 + $0x40] sm:$0xff] %v1052
          %1085 = vst [vmem:[%s348 + $0x48] sm:$0xff] %v1053
          %1086 = vst [vmem:[%s348 + $0x50] sm:$0xff] %v1054
          %1087 = vst [vmem:[%s348 + $0x58] sm:$0xff] %v1055
          %1088 = vst [vmem:[%s348 + $0x60] sm:$0xff] %v1056
          %1089 = vst [vmem:[%s348 + $0x68] sm:$0xff] %v1057
          %1090 = vst [vmem:[%s348 + $0x70] sm:$0xff] %v1058
          %1091 = vst [vmem:[%s348 + $0x78] sm:$0xff] %v1059
          %1092 = vst [vmem:[%s348 + $0x80] sm:$0xff] %v1060
          %1093 = vst [vmem:[%s348 + $0x88] sm:$0xff] %v1061
          %1094 = vst [vmem:[%s348 + $0x90] sm:$0xff] %v1062
          %1095 = vst [vmem:[%s348 + $0x98] sm:$0xff] %v1063
          %1096 = vst [vmem:[%s348 + $0xa0] sm:$0xff] %v1064
          %1097 = vst [vmem:[%s348 + $0xa8] sm:$0xff] %v1065
          %1098 = vst [vmem:[%s348 + $0xb0] sm:$0xff] %v1066
          %1099 = vst [vmem:[%s348 + $0xb8] sm:$0xff] %v1067
          %1100 = vst [vmem:[%s348 + $0xc0] sm:$0xff] %v1068
          %1101 = vst [vmem:[%s348 + $0xc8] sm:$0xff] %v1069
          %1102 = vst [vmem:[%s348 + $0xd0] sm:$0xff] %v1070
          %1103 = vst [vmem:[%s348 + $0xd8] sm:$0xff] %v1071
          %1104 = vst [vmem:[%s348 + $0xe0] sm:$0xff] %v1072
          %1105 = vst [vmem:[%s348 + $0xe8] sm:$0xff] %v1073
          %1106 = vst [vmem:[%s348 + $0xf0] sm:$0xff] %v1074
          %1107 = vst [vmem:[%s348 + $0xf8] sm:$0xff] %v1075
        $region78: #{graph_convolution.3} parent=65 // pred_fallthru
          _
        %s1108 = smul.u32 32, %s18
        %p1109 = scmp.lt.s32.totalorder %s1108, 63
        %s1110 = scalar_select %p1109, %s1108, 63
        %s1111 = smul.addr %s1110, 8
        %s1112 = scalar_lea.vmem %s3, %s1111
        // Predicated region
        $region79: #{graph_convolution.3} parent=65 // pred_check
          %p1113 = pneg %p114
        $region80: #{graph_convolution.3} parent=65 // pred_check_branch
          %1115 = sbr.rel (%p1113) target = $region82
        $region81: #{graph_convolution.3} parent=65 // pred_region
          %s1116 = smul.u32 32, %s18
        $region82: #{graph_convolution.3} parent=65 // pred_fallthru
          _
      $region66: #{graph_convolution.3} parent=5 // pred_fallthru
        _
      %p1117 = scmp.le.s32.totalorder 2, %s9
      // Predicated region
      $region83: #{graph_convolution.3} parent=5 // pred_check
        %p1118 = pneg %p1117
      $region84: #{graph_convolution.3} parent=5 // pred_check_branch
        %1120 = sbr.rel (%p1118) target = $region86
      $region85: #{graph_convolution.3} parent=5 // pred_region
        %s1121 = ssub.s32 %s9, 2
        // Predicated region
        $region87: #{graph_convolution.3} parent=85 // pred_check
          %p1122 = pneg %p120
        $region88: #{graph_convolution.3} parent=85 // pred_check_branch
          %1124 = sbr.rel (%p1122) target = $region90
        $region89: #{graph_convolution.3} parent=85 // pred_region
          %s1125 = smul.u32 32, %s20
          %p1126 = scmp.lt.s32.totalorder %s1125, 63
          %s1127 = scalar_select %p1126, %s1125, 63
          %s1128 = smul.addr %s1127, 8
          %s1129 = scalar_lea.vmem %s3, %s1128
        $region90: #{graph_convolution.3} parent=85 // pred_fallthru
          _
      $region86: #{graph_convolution.3} parent=5 // pred_fallthru
        _
    $region6: #{graph_convolution.3} parent=1 // loop_footer
      %s13 = sadd.s32 1, %s9
    $region7: #{graph_convolution.3} parent=1 // loop_footer_branch
      %8 = sbr.rel target = $region3
    $region8: #{graph_convolution.3} parent=1 // loop_exit
      _

// kernel: graph_convolution.2
$region0: #{graph_convolution.2}
  #allocation0 [shape = 'u32[]', space=smem, size = 0x4, offset = 0x4, fixed_abs, tag = 'smem constant byte address 0x4 - core index']
  #allocation1 [shape = 'u32[144,128]{1,0:T(1,128)}', space=vmem, size = 0x12000, scoped, tag = 'internal scratch']
  %s0 = inlined_call_operand.vmem [shape: bf16[512,64], index: 0, kind: input, shape index: {}]
  %s1 = inlined_call_operand.vmem [shape: bf16[64,128], index: 1, kind: input, shape index: {}]
  %s2 = inlined_call_operand.vmem [shape: bf16[512,128], index: 2, kind: output, shape index: {}]
  %s3 = sld [smem:[#allocation0]]
  $region18: #{graph_convolution.2} parent=0
    _
  %s5 = ssub.s32 1, %s3
  %s6 = scalar_select 0, %s5, %s3
  // Predicated region
  $region2: #{graph_convolution.2} parent=0 // pred_check
    _
  $region3: #{graph_convolution.2} parent=0 // pred_check_branch
    %8 = sbr.rel (0) target = $region5
  $region4: #{graph_convolution.2} parent=0 // pred_region
    _
  $region5: #{graph_convolution.2} parent=0 // pred_fallthru
    _
  // Predicated region
  $region6: #{graph_convolution.2} parent=0 // pred_check
    _
  $region7: #{graph_convolution.2} parent=0 // pred_check_branch
    %10 = sbr.rel (0) target = $region9
  $region8: #{graph_convolution.2} parent=0 // pred_region
    _
  $region9: #{graph_convolution.2} parent=0 // pred_fallthru
    _
  %v12 = vld [vmem:[%s0] sm:$0xf]
  %v13 = vld [vmem:[%s0 + $0x4] sm:$0xf]
  %v14 = vld [vmem:[%s0 + $0x8] sm:$0xf]
  %v15 = vld [vmem:[%s0 + $0xc] sm:$0xf]
  %v16 = vld [vmem:[%s0 + $0x10] sm:$0xf]
  %v17 = vld [vmem:[%s0 + $0x14] sm:$0xf]
  %v18 = vld [vmem:[%s0 + $0x18] sm:$0xf]
  %v19 = vld [vmem:[%s0 + $0x1c] sm:$0xf]
  %v20 = vld [vmem:[%s0 + $0x20] sm:$0xf]
  %v21 = vld [vmem:[%s0 + $0x24] sm:$0xf]
  %v22 = vld [vmem:[%s0 + $0x28] sm:$0xf]
  %v23 = vld [vmem:[%s0 + $0x2c] sm:$0xf]
  %v24 = vld [vmem:[%s0 + $0x30] sm:$0xf]
  %v25 = vld [vmem:[%s0 + $0x34] sm:$0xf]
  %v26 = vld [vmem:[%s0 + $0x38] sm:$0xf]
  %v27 = vld [vmem:[%s0 + $0x3c] sm:$0xf]
  %v28 = vld [vmem:[%s0 + $0x40] sm:$0xf]
  %v29 = vld [vmem:[%s0 + $0x44] sm:$0xf]
  %v30 = vld [vmem:[%s0 + $0x48] sm:$0xf]
  %v31 = vld [vmem:[%s0 + $0x4c] sm:$0xf]
  %v32 = vld [vmem:[%s0 + $0x50] sm:$0xf]
  %v33 = vld [vmem:[%s0 + $0x54] sm:$0xf]
  %v34 = vld [vmem:[%s0 + $0x58] sm:$0xf]
  %v35 = vld [vmem:[%s0 + $0x5c] sm:$0xf]
  %v36 = vld [vmem:[%s0 + $0x60] sm:$0xf]
  %v37 = vld [vmem:[%s0 + $0x64] sm:$0xf]
  %v38 = vld [vmem:[%s0 + $0x68] sm:$0xf]
  %v39 = vld [vmem:[%s0 + $0x6c] sm:$0xf]
  %v40 = vld [vmem:[%s0 + $0x70] sm:$0xf]
  %v41 = vld [vmem:[%s0 + $0x74] sm:$0xf]
  %v42 = vld [vmem:[%s0 + $0x78] sm:$0xf]
  %v43 = vld [vmem:[%s0 + $0x7c] sm:$0xf]
  %v44 = vld [vmem:[%s0 + $0x80] sm:$0xf]
  %v45 = vld [vmem:[%s0 + $0x84] sm:$0xf]
  %v46 = vld [vmem:[%s0 + $0x88] sm:$0xf]
  %v47 = vld [vmem:[%s0 + $0x8c] sm:$0xf]
  %v48 = vld [vmem:[%s0 + $0x90] sm:$0xf]
  %v49 = vld [vmem:[%s0 + $0x94] sm:$0xf]
  %v50 = vld [vmem:[%s0 + $0x98] sm:$0xf]
  %v51 = vld [vmem:[%s0 + $0x9c] sm:$0xf]
  %v52 = vld [vmem:[%s0 + $0xa0] sm:$0xf]
  %v53 = vld [vmem:[%s0 + $0xa4] sm:$0xf]
  %v54 = vld [vmem:[%s0 + $0xa8] sm:$0xf]
  %v55 = vld [vmem:[%s0 + $0xac] sm:$0xf]
  %v56 = vld [vmem:[%s0 + $0xb0] sm:$0xf]
  %v57 = vld [vmem:[%s0 + $0xb4] sm:$0xf]
  %v58 = vld [vmem:[%s0 + $0xb8] sm:$0xf]
  %v59 = vld [vmem:[%s0 + $0xbc] sm:$0xf]
  %v60 = vld [vmem:[%s0 + $0xc0] sm:$0xf]
  %v61 = vld [vmem:[%s0 + $0xc4] sm:$0xf]
  %v62 = vld [vmem:[%s0 + $0xc8] sm:$0xf]
  %v63 = vld [vmem:[%s0 + $0xcc] sm:$0xf]
  %v64 = vld [vmem:[%s0 + $0xd0] sm:$0xf]
  %v65 = vld [vmem:[%s0 + $0xd4] sm:$0xf]
  %v66 = vld [vmem:[%s0 + $0xd8] sm:$0xf]
  %v67 = vld [vmem:[%s0 + $0xdc] sm:$0xf]
  %v68 = vld [vmem:[%s0 + $0xe0] sm:$0xf]
  %v69 = vld [vmem:[%s0 + $0xe4] sm:$0xf]
  %v70 = vld [vmem:[%s0 + $0xe8] sm:$0xf]
  %v71 = vld [vmem:[%s0 + $0xec] sm:$0xf]
  %v72 = vld [vmem:[%s0 + $0xf0] sm:$0xf]
  %v73 = vld [vmem:[%s0 + $0xf4] sm:$0xf]
  %v74 = vld [vmem:[%s0 + $0xf8] sm:$0xf]
  %v75 = vld [vmem:[%s0 + $0xfc] sm:$0xf]
  %v76 = vld [vmem:[%s1] sm:$0xf]
  %v77 = vld [vmem:[%s1 + $0x4] sm:$0xf]
  %v78 = vld [vmem:[%s1 + $0x8] sm:$0xf]
  %v79 = vld [vmem:[%s1 + $0xc] sm:$0xf]
  %v80 = vld [vmem:[%s1 + $0x10] sm:$0xf]
  %v81 = vld [vmem:[%s1 + $0x14] sm:$0xf]
  %v82 = vld [vmem:[%s1 + $0x18] sm:$0xf]
  %v83 = vld [vmem:[%s1 + $0x1c] sm:$0xf]
  %v148 = vunpack.c.l.b16 %v12
  %v149 = vunpack.c.l.b16 %v13
  %v150 = vunpack.c.l.b16 %v14
  %v151 = vunpack.c.l.b16 %v15
  %v152 = vunpack.c.l.b16 %v16
  %v153 = vunpack.c.l.b16 %v17
  %v154 = vunpack.c.l.b16 %v18
  %v155 = vunpack.c.l.b16 %v19
  %v156 = vunpack.c.l.b16 %v20
  %v157 = vunpack.c.l.b16 %v21
  %v158 = vunpack.c.l.b16 %v22
  %v159 = vunpack.c.l.b16 %v23
  %v160 = vunpack.c.l.b16 %v24
  %v161 = vunpack.c.l.b16 %v25
  %v162 = vunpack.c.l.b16 %v26
  %v163 = vunpack.c.l.b16 %v27
  %v164 = vunpack.c.l.b16 %v28
  %v165 = vunpack.c.l.b16 %v29
  %v166 = vunpack.c.l.b16 %v30
  %v167 = vunpack.c.l.b16 %v31
  %v168 = vunpack.c.l.b16 %v32
  %v169 = vunpack.c.l.b16 %v33
  %v170 = vunpack.c.l.b16 %v34
  %v171 = vunpack.c.l.b16 %v35
  %v172 = vunpack.c.l.b16 %v36
  %v173 = vunpack.c.l.b16 %v37
  %v174 = vunpack.c.l.b16 %v38
  %v175 = vunpack.c.l.b16 %v39
  %v176 = vunpack.c.l.b16 %v40
  %v177 = vunpack.c.l.b16 %v41
  %v178 = vunpack.c.l.b16 %v42
  %v179 = vunpack.c.l.b16 %v43
  %v180 = vunpack.c.l.b16 %v44
  %v181 = vunpack.c.l.b16 %v45
  %v182 = vunpack.c.l.b16 %v46
  %v183 = vunpack.c.l.b16 %v47
  %v184 = vunpack.c.l.b16 %v48
  %v185 = vunpack.c.l.b16 %v49
  %v186 = vunpack.c.l.b16 %v50
  %v187 = vunpack.c.l.b16 %v51
  %v188 = vunpack.c.l.b16 %v52
  %v189 = vunpack.c.l.b16 %v53
  %v190 = vunpack.c.l.b16 %v54
  %v191 = vunpack.c.l.b16 %v55
  %v192 = vunpack.c.l.b16 %v56
  %v193 = vunpack.c.l.b16 %v57
  %v194 = vunpack.c.l.b16 %v58
  %v195 = vunpack.c.l.b16 %v59
  %v196 = vunpack.c.l.b16 %v60
  %v197 = vunpack.c.l.b16 %v61
  %v198 = vunpack.c.l.b16 %v62
  %v199 = vunpack.c.l.b16 %v63
  %v200 = vunpack.c.l.b16 %v64
  %v201 = vunpack.c.l.b16 %v65
  %v202 = vunpack.c.l.b16 %v66
  %v203 = vunpack.c.l.b16 %v67
  %v204 = vunpack.c.l.b16 %v68
  %v205 = vunpack.c.l.b16 %v69
  %v206 = vunpack.c.l.b16 %v70
  %v207 = vunpack.c.l.b16 %v71
  %v208 = vunpack.c.l.b16 %v72
  %v209 = vunpack.c.l.b16 %v73
  %v210 = vunpack.c.l.b16 %v74
  %v211 = vunpack.c.l.b16 %v75
  %v212 = vpack.c.b16 %v149, %v148
  %v213 = vpack.c.b16 %v151, %v150
  %v214 = vpack.c.b16 %v153, %v152
  %v215 = vpack.c.b16 %v155, %v154
  %v216 = vpack.c.b16 %v157, %v156
  %v217 = vpack.c.b16 %v159, %v158
  %v218 = vpack.c.b16 %v161, %v160
  %v219 = vpack.c.b16 %v163, %v162
  %v220 = vpack.c.b16 %v165, %v164
  %v221 = vpack.c.b16 %v167, %v166
  %v222 = vpack.c.b16 %v169, %v168
  %v223 = vpack.c.b16 %v171, %v170
  %v224 = vpack.c.b16 %v173, %v172
  %v225 = vpack.c.b16 %v175, %v174
  %v226 = vpack.c.b16 %v177, %v176
  %v227 = vpack.c.b16 %v179, %v178
  %v228 = vpack.c.b16 %v181, %v180
  %v229 = vpack.c.b16 %v183, %v182
  %v230 = vpack.c.b16 %v185, %v184
  %v231 = vpack.c.b16 %v187, %v186
  %v232 = vpack.c.b16 %v189, %v188
  %v233 = vpack.c.b16 %v191, %v190
  %v234 = vpack.c.b16 %v193, %v192
  %v235 = vpack.c.b16 %v195, %v194
  %v236 = vpack.c.b16 %v197, %v196
  %v237 = vpack.c.b16 %v199, %v198
  %v238 = vpack.c.b16 %v201, %v200
  %v239 = vpack.c.b16 %v203, %v202
  %v240 = vpack.c.b16 %v205, %v204
  %v241 = vpack.c.b16 %v207, %v206
  %v242 = vpack.c.b16 %v209, %v208
  %v243 = vpack.c.b16 %v211, %v210
  %v252 = vunpack.c.l.b16 %v76
  %v253 = vunpack.c.l.b16 %v77
  %v254 = vunpack.c.l.b16 %v78
  %v255 = vunpack.c.l.b16 %v79
  %v256 = vunpack.c.l.b16 %v80
  %v257 = vunpack.c.l.b16 %v81
  %v258 = vunpack.c.l.b16 %v82
  %v259 = vunpack.c.l.b16 %v83
  %v260 = vpack.c.b16 %v253, %v252
  %v261 = vpack.c.b16 %v255, %v254
  %v262 = vpack.c.b16 %v257, %v256
  %v263 = vpack.c.b16 %v259, %v258
  %vm268 = vcmask 523264
  %v270 = vsel %vm268, %v212, 0
  %v273 = vsel %vm268, %v213, 0
  %v276 = vsel %vm268, %v214, 0
  %v279 = vsel %vm268, %v215, 0
  %v282 = vsel %vm268, %v216, 0
  %v285 = vsel %vm268, %v217, 0
  %v288 = vsel %vm268, %v218, 0
  %v291 = vsel %vm268, %v219, 0
  %v294 = vsel %vm268, %v220, 0
  %v297 = vsel %vm268, %v221, 0
  %v300 = vsel %vm268, %v222, 0
  %v303 = vsel %vm268, %v223, 0
  %v306 = vsel %vm268, %v224, 0
  %v309 = vsel %vm268, %v225, 0
  %v312 = vsel %vm268, %v226, 0
  %v315 = vsel %vm268, %v227, 0
  %v318 = vsel %vm268, %v228, 0
  %v321 = vsel %vm268, %v229, 0
  %v324 = vsel %vm268, %v230, 0
  %v327 = vsel %vm268, %v231, 0
  %v330 = vsel %vm268, %v232, 0
  %v333 = vsel %vm268, %v233, 0
  %v336 = vsel %vm268, %v234, 0
  %v339 = vsel %vm268, %v235, 0
  %v342 = vsel %vm268, %v236, 0
  %v345 = vsel %vm268, %v237, 0
  %v348 = vsel %vm268, %v238, 0
  %v351 = vsel %vm268, %v239, 0
  %v354 = vsel %vm268, %v240, 0
  %v357 = vsel %vm268, %v241, 0
  %v360 = vsel %vm268, %v242, 0
  %v363 = vsel %vm268, %v243, 0
  %365 = vmatprep.subr.bf16.mxu0 0
  %366 = vmatpush1.bf16.msra.mxu0 %v260
  %367 = vmatprep.subr.bf16.mxu0 0
  %368 = vmatpush1.bf16.msra.mxu0 %v261
  %369 = vmatprep.subr.bf16.mxu0 0
  %370 = vmatpush1.bf16.msra.mxu0 %v262
  %371 = vmatprep.subr.bf16.mxu0 0
  %372 = vmatpush1.bf16.msra.mxu0 %v263
  %373 = vmatprep.subr.bf16.mxu0 0
  %374 = vmatpush1.bf16.msra.mxu0 0
  %375 = vmatprep.subr.bf16.mxu0 0
  %376 = vmatpush1.bf16.msra.mxu0 0
  %377 = vmatprep.subr.bf16.mxu0 0
  %378 = vmatpush1.bf16.msra.mxu0 0
  %379 = vmatprep.subr.bf16.mxu0 0
  %380 = vmatpush1.bf16.msra.mxu0 0
  %381 = vmatprep.subr.bf16.mxu0 0
  %382 = vmatpush1.bf16.msra.mxu0 0
  %383 = vmatprep.subr.bf16.mxu0 0
  %384 = vmatpush1.bf16.msra.mxu0 0
  %385 = vmatprep.subr.bf16.mxu0 0
  %386 = vmatpush1.bf16.msra.mxu0 0
  %387 = vmatprep.subr.bf16.mxu0 0
  %388 = vmatpush1.bf16.msra.mxu0 0
  %389 = vmatprep.subr.bf16.mxu0 0
  %390 = vmatpush1.bf16.msra.mxu0 0
  %391 = vmatprep.subr.bf16.mxu0 0
  %392 = vmatpush1.bf16.msra.mxu0 0
  %393 = vmatprep.subr.bf16.mxu0 0
  %394 = vmatpush1.bf16.msra.mxu0 0
  %395 = vmatprep.subr.bf16.mxu0 0
  %396 = vmatpush1.bf16.msra.mxu0 0
  %397 = vmatprep.mubr.bf16.mxu0 0
  %398 = vmatmul.mubr.bf16.gmra.mrb[0].mxu0 %v270
  %v399 = vpop.f32.mrb[0].mxu0
  %v400 = vadd.f32 0.0, %v399
  %v401 = vpop.f32.mrb[0].mxu0
  %v402 = vpop.f32.mrb[0].mxu0
  %v403 = vadd.f32 0.0, %v402
  %v404 = vpop.f32.mrb[0].mxu0
  %405 = vmatprep.mubr.bf16.mxu0 0
  %406 = vmatmul.mubr.bf16.gmra.mrb[0].mxu0 %v273
  %v407 = vpop.f32.mrb[0].mxu0
  %v408 = vadd.f32 0.0, %v407
  %v409 = vpop.f32.mrb[0].mxu0
  %v410 = vpop.f32.mrb[0].mxu0
  %v411 = vadd.f32 0.0, %v410
  %v412 = vpop.f32.mrb[0].mxu0
  %413 = vmatprep.mubr.bf16.mxu0 0
  %414 = vmatmul.mubr.bf16.gmra.mrb[0].mxu0 %v276
  %v415 = vpop.f32.mrb[0].mxu0
  %v416 = vadd.f32 0.0, %v415
  %v417 = vpop.f32.mrb[0].mxu0
  %v418 = vpop.f32.mrb[0].mxu0
  %v419 = vadd.f32 0.0, %v418
  %v420 = vpop.f32.mrb[0].mxu0
  %421 = vmatprep.mubr.bf16.mxu0 0
  %422 = vmatmul.mubr.bf16.gmra.mrb[0].mxu0 %v279
  %v423 = vpop.f32.mrb[0].mxu0
  %v424 = vadd.f32 0.0, %v423
  %v425 = vpop.f32.mrb[0].mxu0
  %v426 = vpop.f32.mrb[0].mxu0
  %v427 = vadd.f32 0.0, %v426
  %v428 = vpop.f32.mrb[0].mxu0
  %429 = vmatprep.mubr.bf16.mxu0 0
  %430 = vmatmul.mubr.bf16.gmra.mrb[0].mxu0 %v282
  %v431 = vpop.f32.mrb[0].mxu0
  %v432 = vadd.f32 0.0, %v431
  %v433 = vpop.f32.mrb[0].mxu0
  %v434 = vpop.f32.mrb[0].mxu0
  %v435 = vadd.f32 0.0, %v434
  %v436 = vpop.f32.mrb[0].mxu0
  %437 = vmatprep.mubr.bf16.mxu0 0
  %438 = vmatmul.mubr.bf16.gmra.mrb[0].mxu0 %v285
  %v439 = vpop.f32.mrb[0].mxu0
  %v440 = vadd.f32 0.0, %v439
  %v441 = vpop.f32.mrb[0].mxu0
  %v442 = vpop.f32.mrb[0].mxu0
  %v443 = vadd.f32 0.0, %v442
  %v444 = vpop.f32.mrb[0].mxu0
  %445 = vmatprep.mubr.bf16.mxu0 0
  %446 = vmatmul.mubr.bf16.gmra.mrb[0].mxu0 %v288
  %v447 = vpop.f32.mrb[0].mxu0
  %v448 = vadd.f32 0.0, %v447
  %v449 = vpop.f32.mrb[0].mxu0
  %v450 = vpop.f32.mrb[0].mxu0
  %v451 = vadd.f32 0.0, %v450
  %v452 = vpop.f32.mrb[0].mxu0
  %453 = vmatprep.mubr.bf16.mxu0 0
  %454 = vmatmul.mubr.bf16.gmra.mrb[0].mxu0 %v291
  %v455 = vpop.f32.mrb[0].mxu0
  %v456 = vadd.f32 0.0, %v455
  %v457 = vpop.f32.mrb[0].mxu0
  %v458 = vpop.f32.mrb[0].mxu0
  %v459 = vadd.f32 0.0, %v458
  %v460 = vpop.f32.mrb[0].mxu0
  %461 = vmatprep.mubr.bf16.mxu0 0
  %462 = vmatmul.mubr.bf16.gmra.mrb[0].mxu0 %v294
  %v463 = vpop.f32.mrb[0].mxu0
  %v464 = vadd.f32 0.0, %v463
  %v465 = vpop.f32.mrb[0].mxu0
  %v466 = vpop.f32.mrb[0].mxu0
  %v467 = vadd.f32 0.0, %v466
  %v468 = vpop.f32.mrb[0].mxu0
  %469 = vmatprep.mubr.bf16.mxu0 0
  %470 = vmatmul.mubr.bf16.gmra.mrb[0].mxu0 %v297
  %v471 = vpop.f32.mrb[0].mxu0
  %v472 = vadd.f32 0.0, %v471
  %v473 = vpop.f32.mrb[0].mxu0
  %v474 = vpop.f32.mrb[0].mxu0
  %v475 = vadd.f32 0.0, %v474
  %v476 = vpop.f32.mrb[0].mxu0
  %477 = vmatprep.mubr.bf16.mxu0 0
  %478 = vmatmul.mubr.bf16.gmra.mrb[0].mxu0 %v300
  %v479 = vpop.f32.mrb[0].mxu0
  %v480 = vadd.f32 0.0, %v479
  %v481 = vpop.f32.mrb[0].mxu0
  %v482 = vpop.f32.mrb[0].mxu0
  %v483 = vadd.f32 0.0, %v482
  %v484 = vpop.f32.mrb[0].mxu0
  %485 = vmatprep.mubr.bf16.mxu0 0
  %486 = vmatmul.mubr.bf16.gmra.mrb[0].mxu0 %v303
  %v487 = vpop.f32.mrb[0].mxu0
  %v488 = vadd.f32 0.0, %v487
  %v489 = vpop.f32.mrb[0].mxu0
  %v490 = vpop.f32.mrb[0].mxu0
  %v491 = vadd.f32 0.0, %v490
  %v492 = vpop.f32.mrb[0].mxu0
  %493 = vmatprep.mubr.bf16.mxu0 0
  %494 = vmatmul.mubr.bf16.gmra.mrb[0].mxu0 %v306
  %v495 = vpop.f32.mrb[0].mxu0
  %v496 = vadd.f32 0.0, %v495
  %v497 = vpop.f32.mrb[0].mxu0
  %v498 = vpop.f32.mrb[0].mxu0
  %v499 = vadd.f32 0.0, %v498
  %v500 = vpop.f32.mrb[0].mxu0
  %501 = vmatprep.mubr.bf16.mxu0 0
  %502 = vmatmul.mubr.bf16.gmra.mrb[0].mxu0 %v309
  %v503 = vpop.f32.mrb[0].mxu0
  %v504 = vadd.f32 0.0, %v503
  %v505 = vpop.f32.mrb[0].mxu0
  %v506 = vpop.f32.mrb[0].mxu0
  %v507 = vadd.f32 0.0, %v506
  %v508 = vpop.f32.mrb[0].mxu0
  %509 = vmatprep.mubr.bf16.mxu0 0
  %510 = vmatmul.mubr.bf16.gmra.mrb[0].mxu0 %v312
  %v511 = vpop.f32.mrb[0].mxu0
  %v512 = vadd.f32 0.0, %v511
  %v513 = vpop.f32.mrb[0].mxu0
  %v514 = vpop.f32.mrb[0].mxu0
  %v515 = vadd.f32 0.0, %v514
  %v516 = vpop.f32.mrb[0].mxu0
  %517 = vmatprep.mubr.bf16.mxu0 0
  %518 = vmatmul.mubr.bf16.gmra.mrb[0].mxu0 %v315
  %v519 = vpop.f32.mrb[0].mxu0
  %v520 = vadd.f32 0.0, %v519
  %v521 = vpop.f32.mrb[0].mxu0
  %v522 = vpop.f32.mrb[0].mxu0
  %v523 = vadd.f32 0.0, %v522
  %v524 = vpop.f32.mrb[0].mxu0
  %525 = vmatprep.mubr.bf16.mxu0 0
  %526 = vmatmul.mubr.bf16.gmra.mrb[0].mxu0 %v318
  %v527 = vpop.f32.mrb[0].mxu0
  %v528 = vadd.f32 0.0, %v527
  %v529 = vpop.f32.mrb[0].mxu0
  %v530 = vpop.f32.mrb[0].mxu0
  %v531 = vadd.f32 0.0, %v530
  %v532 = vpop.f32.mrb[0].mxu0
  %533 = vmatprep.mubr.bf16.mxu0 0
  %534 = vmatmul.mubr.bf16.gmra.mrb[0].mxu0 %v321
  %v535 = vpop.f32.mrb[0].mxu0
  %v536 = vadd.f32 0.0, %v535
  %v537 = vpop.f32.mrb[0].mxu0
  %v538 = vpop.f32.mrb[0].mxu0
  %v539 = vadd.f32 0.0, %v538
  %v540 = vpop.f32.mrb[0].mxu0
  %541 = vmatprep.mubr.bf16.mxu0 0
  %542 = vmatmul.mubr.bf16.gmra.mrb[0].mxu0 %v324
  %v543 = vpop.f32.mrb[0].mxu0
  %v544 = vadd.f32 0.0, %v543
  %v545 = vpop.f32.mrb[0].mxu0
  %v546 = vpop.f32.mrb[0].mxu0
  %v547 = vadd.f32 0.0, %v546
  %v548 = vpop.f32.mrb[0].mxu0
  %549 = vmatprep.mubr.bf16.mxu0 0
  %550 = vmatmul.mubr.bf16.gmra.mrb[0].mxu0 %v327
  %v551 = vpop.f32.mrb[0].mxu0
  %v552 = vadd.f32 0.0, %v551
  %v553 = vpop.f32.mrb[0].mxu0
  %v554 = vpop.f32.mrb[0].mxu0
  %v555 = vadd.f32 0.0, %v554
  %v556 = vpop.f32.mrb[0].mxu0
  %557 = vmatprep.mubr.bf16.mxu0 0
  %558 = vmatmul.mubr.bf16.gmra.mrb[0].mxu0 %v330
  %v559 = vpop.f32.mrb[0].mxu0
  %v560 = vadd.f32 0.0, %v559
  %v561 = vpop.f32.mrb[0].mxu0
  %v562 = vpop.f32.mrb[0].mxu0
  %v563 = vadd.f32 0.0, %v562
  %v564 = vpop.f32.mrb[0].mxu0
  %565 = vmatprep.mubr.bf16.mxu0 0
  %566 = vmatmul.mubr.bf16.gmra.mrb[0].mxu0 %v333
  %v567 = vpop.f32.mrb[0].mxu0
  %v568 = vadd.f32 0.0, %v567
  %v569 = vpop.f32.mrb[0].mxu0
  %v570 = vpop.f32.mrb[0].mxu0
  %v571 = vadd.f32 0.0, %v570
  %v572 = vpop.f32.mrb[0].mxu0
  %573 = vmatprep.mubr.bf16.mxu0 0
  %574 = vmatmul.mubr.bf16.gmra.mrb[0].mxu0 %v336
  %v575 = vpop.f32.mrb[0].mxu0
  %v576 = vadd.f32 0.0, %v575
  %v577 = vpop.f32.mrb[0].mxu0
  %v578 = vpop.f32.mrb[0].mxu0
  %v579 = vadd.f32 0.0, %v578
  %v580 = vpop.f32.mrb[0].mxu0
  %581 = vmatprep.mubr.bf16.mxu0 0
  %582 = vmatmul.mubr.bf16.gmra.mrb[0].mxu0 %v339
  %v583 = vpop.f32.mrb[0].mxu0
  %v584 = vadd.f32 0.0, %v583
  %v585 = vpop.f32.mrb[0].mxu0
  %v586 = vpop.f32.mrb[0].mxu0
  %v587 = vadd.f32 0.0, %v586
  %v588 = vpop.f32.mrb[0].mxu0
  %589 = vmatprep.mubr.bf16.mxu0 0
  %590 = vmatmul.mubr.bf16.gmra.mrb[0].mxu0 %v342
  %v591 = vpop.f32.mrb[0].mxu0
  %v592 = vadd.f32 0.0, %v591
  %v593 = vpop.f32.mrb[0].mxu0
  %v594 = vpop.f32.mrb[0].mxu0
  %v595 = vadd.f32 0.0, %v594
  %v596 = vpop.f32.mrb[0].mxu0
  %597 = vmatprep.mubr.bf16.mxu0 0
  %598 = vmatmul.mubr.bf16.gmra.mrb[0].mxu0 %v345
  %v599 = vpop.f32.mrb[0].mxu0
  %v600 = vadd.f32 0.0, %v599
  %v601 = vpop.f32.mrb[0].mxu0
  %v602 = vpop.f32.mrb[0].mxu0
  %v603 = vadd.f32 0.0, %v602
  %v604 = vpop.f32.mrb[0].mxu0
  %605 = vmatprep.mubr.bf16.mxu0 0
  %606 = vmatmul.mubr.bf16.gmra.mrb[0].mxu0 %v348
  %v607 = vpop.f32.mrb[0].mxu0
  %v608 = vadd.f32 0.0, %v607
  %v609 = vpop.f32.mrb[0].mxu0
  %v610 = vpop.f32.mrb[0].mxu0
  %v611 = vadd.f32 0.0, %v610
  %v612 = vpop.f32.mrb[0].mxu0
  %613 = vmatprep.mubr.bf16.mxu0 0
  %614 = vmatmul.mubr.bf16.gmra.mrb[0].mxu0 %v351
  %v615 = vpop.f32.mrb[0].mxu0
  %v616 = vadd.f32 0.0, %v615
  %v617 = vpop.f32.mrb[0].mxu0
  %v618 = vpop.f32.mrb[0].mxu0
  %v619 = vadd.f32 0.0, %v618
  %v620 = vpop.f32.mrb[0].mxu0
  %621 = vmatprep.mubr.bf16.mxu0 0
  %622 = vmatmul.mubr.bf16.gmra.mrb[0].mxu0 %v354
  %v623 = vpop.f32.mrb[0].mxu0
  %v624 = vadd.f32 0.0, %v623
  %v625 = vpop.f32.mrb[0].mxu0
  %v626 = vpop.f32.mrb[0].mxu0
  %v627 = vadd.f32 0.0, %v626
  %v628 = vpop.f32.mrb[0].mxu0
  %629 = vmatprep.mubr.bf16.mxu0 0
  %630 = vmatmul.mubr.bf16.gmra.mrb[0].mxu0 %v357
  %v631 = vpop.f32.mrb[0].mxu0
  %v632 = vadd.f32 0.0, %v631
  %v633 = vpop.f32.mrb[0].mxu0
  %v634 = vpop.f32.mrb[0].mxu0
  %v635 = vadd.f32 0.0, %v634
  %v636 = vpop.f32.mrb[0].mxu0
  %637 = vmatprep.mubr.bf16.mxu0 0
  %638 = vmatmul.mubr.bf16.gmra.mrb[0].mxu0 %v360
  %v639 = vpop.f32.mrb[0].mxu0
  %v640 = vadd.f32 0.0, %v639
  %v641 = vpop.f32.mrb[0].mxu0
  %v642 = vpop.f32.mrb[0].mxu0
  %v643 = vadd.f32 0.0, %v642
  %v644 = vpop.f32.mrb[0].mxu0
  %645 = vmatprep.mubr.bf16.mxu0 0
  %646 = vmatmul.mubr.bf16.gmra.mrb[0].mxu0 %v363
  %v647 = vpop.f32.mrb[0].mxu0
  %v648 = vadd.f32 0.0, %v647
  %v649 = vpop.f32.mrb[0].mxu0
  %v650 = vpop.f32.mrb[0].mxu0
  %v651 = vadd.f32 0.0, %v650
  %v652 = vpop.f32.mrb[0].mxu0
  %653 = vdwg.mxu0
  %v654 = vpack.c.bf16 %v403, %v400
  %v655 = vpack.c.bf16 %v411, %v408
  %v656 = vpack.c.bf16 %v419, %v416
  %v657 = vpack.c.bf16 %v427, %v424
  %v658 = vpack.c.bf16 %v435, %v432
  %v659 = vpack.c.bf16 %v443, %v440
  %v660 = vpack.c.bf16 %v451, %v448
  %v661 = vpack.c.bf16 %v459, %v456
  %v662 = vpack.c.bf16 %v467, %v464
  %v663 = vpack.c.bf16 %v475, %v472
  %v664 = vpack.c.bf16 %v483, %v480
  %v665 = vpack.c.bf16 %v491, %v488
  %v666 = vpack.c.bf16 %v499, %v496
  %v667 = vpack.c.bf16 %v507, %v504
  %v668 = vpack.c.bf16 %v515, %v512
  %v669 = vpack.c.bf16 %v523, %v520
  %v670 = vpack.c.bf16 %v531, %v528
  %v671 = vpack.c.bf16 %v539, %v536
  %v672 = vpack.c.bf16 %v547, %v544
  %v673 = vpack.c.bf16 %v555, %v552
  %v674 = vpack.c.bf16 %v563, %v560
  %v675 = vpack.c.bf16 %v571, %v568
  %v676 = vpack.c.bf16 %v579, %v576
  %v677 = vpack.c.bf16 %v587, %v584
  %v678 = vpack.c.bf16 %v595, %v592
  %v679 = vpack.c.bf16 %v603, %v600
  %v680 = vpack.c.bf16 %v611, %v608
  %v681 = vpack.c.bf16 %v619, %v616
  %v682 = vpack.c.bf16 %v627, %v624
  %v683 = vpack.c.bf16 %v635, %v632
  %v684 = vpack.c.bf16 %v643, %v640
  %v685 = vpack.c.bf16 %v651, %v648
  %v718 = vunpack.c.l.b16 %v654
  %v719 = vunpack.c.h.b16 %v654
  %v720 = vunpack.c.l.b16 %v655
  %v721 = vunpack.c.h.b16 %v655
  %v722 = vunpack.c.l.b16 %v656
  %v723 = vunpack.c.h.b16 %v656
  %v724 = vunpack.c.l.b16 %v657
  %v725 = vunpack.c.h.b16 %v657
  %v726 = vunpack.c.l.b16 %v658
  %v727 = vunpack.c.h.b16 %v658
  %v728 = vunpack.c.l.b16 %v659
  %v729 = vunpack.c.h.b16 %v659
  %v730 = vunpack.c.l.b16 %v660
  %v731 = vunpack.c.h.b16 %v660
  %v732 = vunpack.c.l.b16 %v661
  %v733 = vunpack.c.h.b16 %v661
  %v734 = vunpack.c.l.b16 %v662
  %v735 = vunpack.c.h.b16 %v662
  %v736 = vunpack.c.l.b16 %v663
  %v737 = vunpack.c.h.b16 %v663
  %v738 = vunpack.c.l.b16 %v664
  %v739 = vunpack.c.h.b16 %v664
  %v740 = vunpack.c.l.b16 %v665
  %v741 = vunpack.c.h.b16 %v665
  %v742 = vunpack.c.l.b16 %v666
  %v743 = vunpack.c.h.b16 %v666
  %v744 = vunpack.c.l.b16 %v667
  %v745 = vunpack.c.h.b16 %v667
  %v746 = vunpack.c.l.b16 %v668
  %v747 = vunpack.c.h.b16 %v668
  %v748 = vunpack.c.l.b16 %v669
  %v749 = vunpack.c.h.b16 %v669
  %v750 = vunpack.c.l.b16 %v670
  %v751 = vunpack.c.h.b16 %v670
  %v752 = vunpack.c.l.b16 %v671
  %v753 = vunpack.c.h.b16 %v671
  %v754 = vunpack.c.l.b16 %v672
  %v755 = vunpack.c.h.b16 %v672
  %v756 = vunpack.c.l.b16 %v673
  %v757 = vunpack.c.h.b16 %v673
  %v758 = vunpack.c.l.b16 %v674
  %v759 = vunpack.c.h.b16 %v674
  %v760 = vunpack.c.l.b16 %v675
  %v761 = vunpack.c.h.b16 %v675
  %v762 = vunpack.c.l.b16 %v676
  %v763 = vunpack.c.h.b16 %v676
  %v764 = vunpack.c.l.b16 %v677
  %v765 = vunpack.c.h.b16 %v677
  %v766 = vunpack.c.l.b16 %v678
  %v767 = vunpack.c.h.b16 %v678
  %v768 = vunpack.c.l.b16 %v679
  %v769 = vunpack.c.h.b16 %v679
  %v770 = vunpack.c.l.b16 %v680
  %v771 = vunpack.c.h.b16 %v680
  %v772 = vunpack.c.l.b16 %v681
  %v773 = vunpack.c.h.b16 %v681
  %v774 = vunpack.c.l.b16 %v682
  %v775 = vunpack.c.h.b16 %v682
  %v776 = vunpack.c.l.b16 %v683
  %v777 = vunpack.c.h.b16 %v683
  %v778 = vunpack.c.l.b16 %v684
  %v779 = vunpack.c.h.b16 %v684
  %v780 = vunpack.c.l.b16 %v685
  %v781 = vunpack.c.h.b16 %v685
  %v782 = vpack.c.b16 %v718, %v718
  %v783 = vpack.c.b16 %v719, %v719
  %v784 = vpack.c.b16 %v720, %v720
  %v785 = vpack.c.b16 %v721, %v721
  %v786 = vpack.c.b16 %v722, %v722
  %v787 = vpack.c.b16 %v723, %v723
  %v788 = vpack.c.b16 %v724, %v724
  %v789 = vpack.c.b16 %v725, %v725
  %v790 = vpack.c.b16 %v726, %v726
  %v791 = vpack.c.b16 %v727, %v727
  %v792 = vpack.c.b16 %v728, %v728
  %v793 = vpack.c.b16 %v729, %v729
  %v794 = vpack.c.b16 %v730, %v730
  %v795 = vpack.c.b16 %v731, %v731
  %v796 = vpack.c.b16 %v732, %v732
  %v797 = vpack.c.b16 %v733, %v733
  %v798 = vpack.c.b16 %v734, %v734
  %v799 = vpack.c.b16 %v735, %v735
  %v800 = vpack.c.b16 %v736, %v736
  %v801 = vpack.c.b16 %v737, %v737
  %v802 = vpack.c.b16 %v738, %v738
  %v803 = vpack.c.b16 %v739, %v739
  %v804 = vpack.c.b16 %v740, %v740
  %v805 = vpack.c.b16 %v741, %v741
  %v806 = vpack.c.b16 %v742, %v742
  %v807 = vpack.c.b16 %v743, %v743
  %v808 = vpack.c.b16 %v744, %v744
  %v809 = vpack.c.b16 %v745, %v745
  %v810 = vpack.c.b16 %v746, %v746
  %v811 = vpack.c.b16 %v747, %v747
  %v812 = vpack.c.b16 %v748, %v748
  %v813 = vpack.c.b16 %v749, %v749
  %v814 = vpack.c.b16 %v750, %v750
  %v815 = vpack.c.b16 %v751, %v751
  %v816 = vpack.c.b16 %v752, %v752
  %v817 = vpack.c.b16 %v753, %v753
  %v818 = vpack.c.b16 %v754, %v754
  %v819 = vpack.c.b16 %v755, %v755
  %v820 = vpack.c.b16 %v756, %v756
  %v821 = vpack.c.b16 %v757, %v757
  %v822 = vpack.c.b16 %v758, %v758
  %v823 = vpack.c.b16 %v759, %v759
  %v824 = vpack.c.b16 %v760, %v760
  %v825 = vpack.c.b16 %v761, %v761
  %v826 = vpack.c.b16 %v762, %v762
  %v827 = vpack.c.b16 %v763, %v763
  %v828 = vpack.c.b16 %v764, %v764
  %v829 = vpack.c.b16 %v765, %v765
  %v830 = vpack.c.b16 %v766, %v766
  %v831 = vpack.c.b16 %v767, %v767
  %v832 = vpack.c.b16 %v768, %v768
  %v833 = vpack.c.b16 %v769, %v769
  %v834 = vpack.c.b16 %v770, %v770
  %v835 = vpack.c.b16 %v771, %v771
  %v836 = vpack.c.b16 %v772, %v772
  %v837 = vpack.c.b16 %v773, %v773
  %v838 = vpack.c.b16 %v774, %v774
  %v839 = vpack.c.b16 %v775, %v775
  %v840 = vpack.c.b16 %v776, %v776
  %v841 = vpack.c.b16 %v777, %v777
  %v842 = vpack.c.b16 %v778, %v778
  %v843 = vpack.c.b16 %v779, %v779
  %v844 = vpack.c.b16 %v780, %v780
  %v845 = vpack.c.b16 %v781, %v781
  %910 = vst [vmem:[%s2] sm:$0xf] %v782
  %911 = vst [vmem:[%s2 + $0x4] sm:$0xf] %v783
  %912 = vst [vmem:[%s2 + $0x8] sm:$0xf] %v784
  %913 = vst [vmem:[%s2 + $0xc] sm:$0xf] %v785
  %914 = vst [vmem:[%s2 + $0x10] sm:$0xf] %v786
  %915 = vst [vmem:[%s2 + $0x14] sm:$0xf] %v787
  %916 = vst [vmem:[%s2 + $0x18] sm:$0xf] %v788
  %917 = vst [vmem:[%s2 + $0x1c] sm:$0xf] %v789
  %918 = vst [vmem:[%s2 + $0x20] sm:$0xf] %v790
  %919 = vst [vmem:[%s2 + $0x24] sm:$0xf] %v791
  %920 = vst [vmem:[%s2 + $0x28] sm:$0xf] %v792
  %921 = vst [vmem:[%s2 + $0x2c] sm:$0xf] %v793
  %922 = vst [vmem:[%s2 + $0x30] sm:$0xf] %v794
  %923 = vst [vmem:[%s2 + $0x34] sm:$0xf] %v795
  %924 = vst [vmem:[%s2 + $0x38] sm:$0xf] %v796
  %925 = vst [vmem:[%s2 + $0x3c] sm:$0xf] %v797
  %926 = vst [vmem:[%s2 + $0x40] sm:$0xf] %v798
  %927 = vst [vmem:[%s2 + $0x44] sm:$0xf] %v799
  %928 = vst [vmem:[%s2 + $0x48] sm:$0xf] %v800
  %929 = vst [vmem:[%s2 + $0x4c] sm:$0xf] %v801
  %930 = vst [vmem:[%s2 + $0x50] sm:$0xf] %v802
  %931 = vst [vmem:[%s2 + $0x54] sm:$0xf] %v803
  %932 = vst [vmem:[%s2 + $0x58] sm:$0xf] %v804
  %933 = vst [vmem:[%s2 + $0x5c] sm:$0xf] %v805
  %934 = vst [vmem:[%s2 + $0x60] sm:$0xf] %v806
  %935 = vst [vmem:[%s2 + $0x64] sm:$0xf] %v807
  %936 = vst [vmem:[%s2 + $0x68] sm:$0xf] %v808
  %937 = vst [vmem:[%s2 + $0x6c] sm:$0xf] %v809
  %938 = vst [vmem:[%s2 + $0x70] sm:$0xf] %v810
  %939 = vst [vmem:[%s2 + $0x74] sm:$0xf] %v811
  %940 = vst [vmem:[%s2 + $0x78] sm:$0xf] %v812
  %941 = vst [vmem:[%s2 + $0x7c] sm:$0xf] %v813
  %942 = vst [vmem:[%s2 + $0x80] sm:$0xf] %v814
  %943 = vst [vmem:[%s2 + $0x84] sm:$0xf] %v815
  %944 = vst [vmem:[%s2 + $0x88] sm:$0xf] %v816
  %945 = vst [vmem:[%s2 + $0x8c] sm:$0xf] %v817
  %946 = vst [vmem:[%s2 + $0x90] sm:$0xf] %v818
  %947 = vst [vmem:[%s2 + $0x94] sm:$0xf] %v819
  %948 = vst [vmem:[%s2 + $0x98] sm:$0xf] %v820
  %949 = vst [vmem:[%s2 + $0x9c] sm:$0xf] %v821
  %950 = vst [vmem:[%s2 + $0xa0] sm:$0xf] %v822
  %951 = vst [vmem:[%s2 + $0xa4] sm:$0xf] %v823
  %952 = vst [vmem:[%s2 + $0xa8] sm:$0xf] %v824
  %953 = vst [vmem:[%s2 + $0xac] sm:$0xf] %v825
  %954 = vst [vmem:[%s2 + $0xb0] sm:$0xf] %v826
  %955 = vst [vmem:[%s2 + $0xb4] sm:$0xf] %v827
  %956 = vst [vmem:[%s2 + $0xb8] sm:$0xf] %v828
  %957 = vst [vmem:[%s2 + $0xbc] sm:$0xf] %v829
  %958 = vst [vmem:[%s2 + $0xc0] sm:$0xf] %v830
  %959 = vst [vmem:[%s2 + $0xc4] sm:$0xf] %v831
  %960 = vst [vmem:[%s2 + $0xc8] sm:$0xf] %v832
  %961 = vst [vmem:[%s2 + $0xcc] sm:$0xf] %v833
  %962 = vst [vmem:[%s2 + $0xd0] sm:$0xf] %v834
  %963 = vst [vmem:[%s2 + $0xd4] sm:$0xf] %v835
  %964 = vst [vmem:[%s2 + $0xd8] sm:$0xf] %v836
  %965 = vst [vmem:[%s2 + $0xdc] sm:$0xf] %v837
  %966 = vst [vmem:[%s2 + $0xe0] sm:$0xf] %v838
  %967 = vst [vmem:[%s2 + $0xe4] sm:$0xf] %v839
  %968 = vst [vmem:[%s2 + $0xe8] sm:$0xf] %v840
  %969 = vst [vmem:[%s2 + $0xec] sm:$0xf] %v841
  %970 = vst [vmem:[%s2 + $0xf0] sm:$0xf] %v842
  %971 = vst [vmem:[%s2 + $0xf4] sm:$0xf] %v843
  %972 = vst [vmem:[%s2 + $0xf8] sm:$0xf] %v844
  %973 = vst [vmem:[%s2 + $0xfc] sm:$0xf] %v845
  // Predicated region
  $region10: #{graph_convolution.2} parent=0 // pred_check
    _
  $region11: #{graph_convolution.2} parent=0 // pred_check_branch
    %975 = sbr.rel (0) target = $region13
  $region12: #{graph_convolution.2} parent=0 // pred_region
    _
  $region13: #{graph_convolution.2} parent=0 // pred_fallthru
    _
  // Predicated region
  $region14: #{graph_convolution.2} parent=0 // pred_check
    _
  $region15: #{graph_convolution.2} parent=0 // pred_check_branch
    %977 = sbr.rel (0) target = $region17
  $region16: #{graph_convolution.2} parent=0 // pred_region
    _
  $region17: #{graph_convolution.2} parent=0 // pred_fallthru
    _

</llo_original>
